<compile_context>
chip_gen: v5e
topology: v5e:2x2
jax: 0.10.0
libtpu: 0.0.40
codegen_flags: <defaults>
</compile_context>

<pallas_src>
import jax
import jax.numpy as jnp
from jax import lax
from jax.experimental import pallas as pl
from jax.experimental.pallas import tpu as pltpu

# ---------------- configuration (small, self-consistent shapes) ----------------
IN_DIM = 6                       # raw node features
ENC_PAD = 16                     # x / enc_w1 K-dim padding (bf16-row-aligned)
HIDDEN = 32                      # kwargs['h_dim']
TRANS_DIM = 64                   # kwargs['trans_dim']
D_MODEL = TRANS_DIM // 2         # Mamba2 d_model == hidden_dim (required by forward)
D_STATE = 16
D_CONV = 4
EXPAND = 2
D_INNER = EXPAND * D_MODEL       # 64
HEADDIM = 32
NHEADS = D_INNER // HEADDIM      # 2
BLOCK_SIZE = 16                  # kwargs['block_size'] (pad nodes to multiple of this)
N_RAW = 14                       # raw number of nodes
D_IN_PROJ = 2 * D_INNER + 2 * D_STATE + NHEADS   # 162
CONV_DIM = D_INNER + 2 * D_STATE                 # 96
MLP_HID = 128                    # mlp_out hidden_channels
EPS = 1e-5

assert HIDDEN == D_MODEL

# ---- vecs slab row map (f32, 24 x 128) ----
V_ENC_B1, V_ENC_B2, V_NORM_W, V_NORMF_W = 0, 1, 2, 3
V_CONV_B, V_RMS_W, V_BM4 = 4, 5, 6
V_DT_BIAS, V_A_NEG, V_D = 7, 8, 9
V_AUX = 10                       # rows 10..18: (bias, gamma, beta) x 3 hidden MLP layers
V_CONV_W = 19                    # rows 19..22: conv taps 0..3
V_ROWS = 24

# ---- w32 slab row map (bf16, 272 x 32, offsets all multiples of 16) ----
W_ENC1, W_ENC2, W_W0, W_WOUT, W_WM4, W32_ROWS = 0, 16, 48, 80, 144, 272

# ---- wmid slab: rows 0:32 = reordered in_proj (192 lanes), rows 32:64 = wm1 ----
WMID_LANES = 192
IN_XBC, IN_DT, IN_Z = 0, CONV_DIM, 128           # lane offsets of the in_proj groups


# ---------------- small math helpers (used inside the kernel) ----------------
def _mm(a, b):                   # f32 activation x f32 activation
    return jnp.dot(a, b, preferred_element_type=jnp.float32)


def _mm_nt(a, b):                # a @ b.T (contract last dims)
    return lax.dot_general(a, b, (((1,), (1,)), ((), ())),
                           preferred_element_type=jnp.float32)


def _mmw(a, w_bf16):             # f32 activation x bf16 weight slab slice, f32 accumulate
    return jnp.dot(a.astype(jnp.bfloat16), w_bf16,
                   preferred_element_type=jnp.float32)


def _softplus(v):                # matches torch.F.softplus (threshold=20), finite both branches
    return jnp.where(v > 20.0, v, jnp.log(1.0 + jnp.exp(jnp.minimum(v, 20.0))))


def _silu(v):
    return v * jax.nn.sigmoid(v)


def _rmsnorm(x, w):
    return x * lax.rsqrt(jnp.mean(x * x, axis=-1, keepdims=True) + EPS) * w


def _layernorm(x, g, b):
    mu = jnp.mean(x, axis=-1, keepdims=True)
    xc = x - mu
    var = jnp.mean(xc * xc, axis=-1, keepdims=True)
    return xc * lax.rsqrt(var + EPS) * g + b


# ---------------- fused forward kernel ----------------
def _jamba_fused_kernel(x_ref, vec_ref, w32_ref, wmid_ref, wm23_ref, o_ref):
    L = x_ref.shape[0]
    v = vec_ref

    # ---- feature_encoder: Linear -> ReLU -> Linear ----
    h0 = jnp.maximum(_mmw(x_ref[...], w32_ref[W_ENC1:W_ENC2, :])
                     + v[V_ENC_B1:V_ENC_B1 + 1, :HIDDEN], 0.0)
    x = _mmw(h0, w32_ref[W_ENC2:W_W0, :]) + v[V_ENC_B2:V_ENC_B2 + 1, :HIDDEN]   # (L, D_MODEL)

    # shared iotas / masks, computed once and reused by conv + SSD
    row2 = lax.broadcasted_iota(jnp.int32, (L, L), 0)
    col2 = lax.broadcasted_iota(jnp.int32, (L, L), 1)
    causal = col2 <= row2
    row1 = lax.broadcasted_iota(jnp.int32, (L, 1), 0)
    lane_i = lax.broadcasted_iota(jnp.int32, (1, D_INNER), 1)

    # ---- backbone layer 0: RMSNorm -> Mamba2 mixer -> residual ----
    xn = _rmsnorm(x, v[V_NORM_W:V_NORM_W + 1, :D_MODEL])
    proj = _mmw(xn, wmid_ref[0:D_MODEL, :])                    # (L, 192), lane-aligned groups
    xBC = proj[:, IN_XBC:IN_XBC + CONV_DIM]                    # (L, 96)  lanes 0:96
    dt_raw = proj[:, IN_DT:IN_DT + NHEADS]                     # (L, 2)   lanes 96:98
    z = proj[:, IN_Z:IN_Z + D_INNER]                           # (L, 64)  lanes 128:192

    # causal depthwise Conv1d (padding K-1, cropped to L) via sublane roll + (L,1) mask
    acc = xBC * v[V_CONV_W + D_CONV - 1:V_CONV_W + D_CONV, :CONV_DIM]   # zero-shift tap
    for w in range(D_CONV - 1):
        s = D_CONV - 1 - w                                     # left shift amount
        shifted = jnp.where(row1 >= s, pltpu.roll(xBC, shift=s, axis=0), 0.0)
        acc = acc + shifted * v[V_CONV_W + w:V_CONV_W + w + 1, :CONV_DIM]
    xBC_c = _silu(acc + v[V_CONV_B:V_CONV_B + 1, :CONV_DIM])

    xs = xBC_c[:, :D_INNER]                                    # (L, D_INNER)
    Bm = xBC_c[:, D_INNER:D_INNER + D_STATE]                   # (L, D_STATE)
    Cm = xBC_c[:, D_INNER + D_STATE:CONV_DIM]                  # (L, D_STATE)

    # single-chunk SSD:  y[t] = sum_{s<=t} (C_t.B_s) exp(sum_{k=s+1..t} A*dt_k) dt_s x_s
    cb = jnp.where(causal, _mm_nt(Cm, Bm), 0.0)                # (L, L), shared by heads

    # dt / decay for both heads at once
    dt_sp = _softplus(dt_raw + v[V_DT_BIAS:V_DT_BIAS + 1, :NHEADS])     # (L, NHEADS)
    adt = dt_sp * v[V_A_NEG:V_A_NEG + 1, :NHEADS]              # A*dt (<= 0), (L, NHEADS)
    cs = adt                                                   # inclusive cumsum along time
    sh = 1
    while sh < L:                                              # 4 rolls on (16, 2)
        cs = cs + jnp.where(row1 >= sh, pltpu.roll(cs, shift=sh, axis=0), 0.0)
        sh *= 2

    ones_col = jnp.ones((L, 1), jnp.float32)
    m_parts, xd_parts = [], []
    for h in range(NHEADS):
        cs_h = cs[:, h:h + 1]                                  # (L,1): cs[t]
        cs_s = _mm_nt(ones_col, cs_h)                          # (L,L): cs[s] via rank-1 MXU bcast
        seg = jnp.where(causal, cs_h - cs_s, -1e30)            # mask BEFORE exp (stable)
        m_parts.append(jnp.exp(seg) * cb)                      # decay-weighted C B^T
        head_mask = (lane_i >= h * HEADDIM) & (lane_i < (h + 1) * HEADDIM)
        xd_parts.append(jnp.where(head_mask, xs * dt_sp[:, h:h + 1], 0.0))
    mmat = jnp.concatenate(m_parts, axis=1)                    # (L, 2L)
    xd = jnp.concatenate(xd_parts, axis=0)                     # (2L, D_INNER)
    y = xs * v[V_D:V_D + 1, :D_INNER] + _mm(mmat, xd)          # D skip + fused head matmul

    # gated RMSNorm, out_proj, residual
    y = _rmsnorm(y * _silu(z), v[V_RMS_W:V_RMS_W + 1, :D_INNER])
    x = x + _mmw(y, w32_ref[W_WOUT:W_WM4, :])

    # TODO(synk): backbone layer 1 (LSHAtt) depends on HEPTAttention / get_regions /
    # quantile_partition which are undefined in the reference source; pass-through.

    # ---- head: norm_f -> W0 -> mlp_out (Linear/LayerNorm/ReLU x3 + Linear) + residual ----
    xn = _rmsnorm(x, v[V_NORMF_W:V_NORMF_W + 1, :D_MODEL])
    x0 = _mmw(xn, w32_ref[W_W0:W_WOUT, :])                     # W0 (no bias)
    h1 = jnp.maximum(_layernorm(_mmw(x0, wmid_ref[D_MODEL:2 * D_MODEL, :MLP_HID])
                                + v[V_AUX + 0:V_AUX + 1, :],
                                v[V_AUX + 1:V_AUX + 2, :], v[V_AUX + 2:V_AUX + 3, :]), 0.0)
    h2 = jnp.maximum(_layernorm(_mmw(h1, wm23_ref[:, :MLP_HID])
                                + v[V_AUX + 3:V_AUX + 4, :],
                                v[V_AUX + 4:V_AUX + 5, :], v[V_AUX + 5:V_AUX + 6, :]), 0.0)
    h3 = jnp.maximum(_layernorm(_mmw(h2, wm23_ref[:, MLP_HID:])
                                + v[V_AUX + 6:V_AUX + 7, :],
                                v[V_AUX + 7:V_AUX + 8, :], v[V_AUX + 8:V_AUX + 9, :]), 0.0)
    o_ref[...] = x0 + _mmw(h3, w32_ref[W_WM4:W32_ROWS, :]) + v[V_BM4:V_BM4 + 1, :HIDDEN]


# ---------------- parameter init (deterministic, synthetic, slab-packed) ----------------
def init_params(key):
    keys = list(jax.random.split(key, 32))
    it = iter(keys)

    def nrm(shape, scale):
        return (scale * jax.random.normal(next(it), shape)).astype(jnp.float32)

    # raw parameters (f32, reference layouts)
    enc_w1 = nrm((IN_DIM, HIDDEN), 0.3)
    enc_w2 = nrm((HIDDEN, HIDDEN), 0.15)
    w_in = nrm((D_MODEL, D_IN_PROJ), 0.1)        # reference column order: [z | xBC | dt]
    conv_w = nrm((D_CONV, CONV_DIM), 0.2)
    conv_b = nrm((1, CONV_DIM), 0.02)
    w_out = nrm((D_INNER, D_MODEL), 0.1)
    w0 = nrm((D_MODEL, HIDDEN), 0.15)
    wm1 = nrm((HIDDEN, MLP_HID), 0.15)
    wm2 = nrm((MLP_HID, MLP_HID), 0.1)
    wm3 = nrm((MLP_HID, MLP_HID), 0.1)
    wm4 = nrm((MLP_HID, HIDDEN), 0.1)
    dt_bias = nrm((NHEADS,), 0.1)
    a_neg = -jnp.exp(jnp.log(jnp.arange(1, NHEADS + 1, dtype=jnp.float32)))  # -exp(A_log)
    d_par = jnp.ones((NHEADS,), jnp.float32)

    # --- vecs slab: (24, 128) f32, one broadcast vector per row (lane 0 aligned) ---
    vecs = jnp.zeros((V_ROWS, 128), jnp.float32)
    vecs = vecs.at[V_NORM_W, :D_MODEL].set(1.0)                  # RMSNorm weight (layer0)
    vecs = vecs.at[V_NORMF_W, :D_MODEL].set(1.0)                 # norm_f weight
    vecs = vecs.at[V_CONV_B, :CONV_DIM].set(conv_b[0])
    vecs = vecs.at[V_RMS_W, :D_INNER].set(1.0)                   # gated RMSNorm weight
    vecs = vecs.at[V_DT_BIAS, :NHEADS].set(dt_bias)
    vecs = vecs.at[V_A_NEG, :NHEADS].set(a_neg)
    vecs = vecs.at[V_D, :D_INNER].set(jnp.repeat(d_par, HEADDIM))
    for j in range(3):                                           # MLP LN: bias=0, gamma=1, beta=0
        vecs = vecs.at[V_AUX + 3 * j + 1, :MLP_HID].set(1.0)
    vecs = vecs.at[V_CONV_W:V_CONV_W + D_CONV, :CONV_DIM].set(conv_w)
    # enc_b1 / enc_b2 / bm4 / MLP biases / LN betas stay zero (rows already zero).

    # --- w32 slab: (272, 32) bf16, row offsets all multiples of 16 ---
    w32 = jnp.zeros((W32_ROWS, HIDDEN), jnp.float32)
    w32 = w32.at[W_ENC1:W_ENC1 + IN_DIM, :].set(enc_w1)          # K padded 6 -> 16
    w32 = w32.at[W_ENC2:W_W0, :].set(enc_w2)
    w32 = w32.at[W_W0:W_WOUT, :].set(w0)
    w32 = w32.at[W_WOUT:W_WM4, :].set(w_out)
    w32 = w32.at[W_WM4:W32_ROWS, :].set(wm4)
    w32 = w32.astype(jnp.bfloat16)

    # --- wmid slab: (64, 192) bf16: reordered in_proj (rows 0:32) + wm1 (rows 32:64) ---
    # in_proj output lane order inside kernel: [xBC (0:96) | dt (96:98) | pad | z (128:192)]
    w_in_packed = jnp.zeros((D_MODEL, WMID_LANES), jnp.float32)
    w_in_packed = w_in_packed.at[:, IN_XBC:IN_XBC + CONV_DIM].set(
        w_in[:, D_INNER:D_INNER + CONV_DIM])
    w_in_packed = w_in_packed.at[:, IN_DT:IN_DT + NHEADS].set(
        w_in[:, D_INNER + CONV_DIM:])
    w_in_packed = w_in_packed.at[:, IN_Z:IN_Z + D_INNER].set(w_in[:, :D_INNER])
    wmid = jnp.zeros((2 * D_MODEL, WMID_LANES), jnp.float32)
    wmid = wmid.at[0:D_MODEL, :].set(w_in_packed)
    wmid = wmid.at[D_MODEL:2 * D_MODEL, :MLP_HID].set(wm1)
    wmid = wmid.astype(jnp.bfloat16)

    # --- wm23 slab: (128, 256) bf16 = [wm2 | wm3] on the lane axis ---
    wm23 = jnp.concatenate([wm2, wm3], axis=1).astype(jnp.bfloat16)

    return {"vecs": vecs, "w32": w32, "wmid": wmid, "wm23": wm23}


# ---------------- forward (single fused pallas_call) ----------------
def jamba_forward(x_raw, params):
    raw_size = x_raw.shape[0]
    pad_len = (-raw_size) % BLOCK_SIZE
    lpad = raw_size + pad_len
    # pad nodes to block_size (zeros at the end; all mixing ops are causal) and pad
    # the feature dim 6 -> 16 to match the enc_w1 row padding.
    x = jnp.pad(x_raw, ((0, pad_len), (0, ENC_PAD - IN_DIM)))

    args = (x, params["vecs"], params["w32"], params["wmid"], params["wm23"])
    vmem = pltpu.MemorySpace.VMEM

    out = pl.pallas_call(
        _jamba_fused_kernel,
        out_shape=jax.ShapeDtypeStruct((lpad, HIDDEN), jnp.float32),
        in_specs=[pl.BlockSpec(memory_space=vmem) for _ in args],
        out_specs=pl.BlockSpec(memory_space=vmem),
    )(*args)

    return out[:raw_size, :]                                     # out[:raw_size]


if __name__ == "__main__":
    key = jax.random.PRNGKey(0)
    kx, kp = jax.random.split(key)
    # node features; edge_index / coords / batch of the original forward are only
    # consumed by the untranslatable LSH-attention path and are omitted.
    x_raw = jax.random.normal(kx, (N_RAW, IN_DIM), dtype=jnp.float32)
    params = init_params(kp)

    fwd = jax.jit(jamba_forward)
    out = jax.block_until_ready(fwd(x_raw, params))

    assert out.shape == (N_RAW, HIDDEN), out.shape
    assert bool(jnp.all(jnp.isfinite(out)))
    print("KERNEL_OK")
</pallas_src>

<mosaic_0001>
module attributes {stable_mosaic.version = 11 : i64} {
  func.func @_jamba_fused_kernel(%arg0: memref<16x16xf32, #tpu.memory_space<vmem>>, %arg1: memref<24x128xf32, #tpu.memory_space<vmem>>, %arg2: memref<272x32xbf16, #tpu.memory_space<vmem>>, %arg3: memref<64x192xbf16, #tpu.memory_space<vmem>>, %arg4: memref<128x256xbf16, #tpu.memory_space<vmem>>, %arg5: memref<16x32xf32, #tpu.memory_space<vmem>>) attributes {dimension_semantics = [], scalar_prefetch = 0 : i64, scratch_operands = 0 : i64, tpu.core_type = #tpu.core_type<tc>} {
    %c0 = arith.constant 0 : index
    %c0_0 = arith.constant 0 : index
    %0 = vector.load %arg0[%c0, %c0_0] : memref<16x16xf32, #tpu.memory_space<vmem>>, vector<16x16xf32>
    %c0_1 = arith.constant 0 : index
    %c0_2 = arith.constant 0 : index
    %1 = vector.load %arg2[%c0_1, %c0_2] : memref<272x32xbf16, #tpu.memory_space<vmem>>, vector<16x32xbf16>
    %2 = arith.truncf %0 : vector<16x16xf32> to vector<16x16xbf16>
    %cst = arith.constant dense<0.000000e+00> : vector<16x32xf32>
    %3 = tpu.matmul %2, %1, %cst {dimension_numbers = #tpu.dot_dimension_numbers<[1], [0], [0], [1], [0, 0, 1, 1], [], []>} : vector<16x16xbf16>, vector<16x32xbf16>, vector<16x32xf32> -> vector<16x32xf32>
    %c0_3 = arith.constant 0 : index
    %c0_4 = arith.constant 0 : index
    %4 = vector.load %arg1[%c0_3, %c0_4] : memref<24x128xf32, #tpu.memory_space<vmem>>, vector<1x32xf32>
    %5 = vector.broadcast %4 : vector<1x32xf32> to vector<16x32xf32>
    %6 = arith.addf %3, %5 : vector<16x32xf32>
    %cst_5 = arith.constant 0.000000e+00 : f32
    %7 = vector.broadcast %cst_5 : f32 to vector<16x32xf32>
    %8 = arith.maximumf %6, %7 : vector<16x32xf32>
    %c16 = arith.constant 16 : index
    %c0_6 = arith.constant 0 : index
    %9 = vector.load %arg2[%c16, %c0_6] : memref<272x32xbf16, #tpu.memory_space<vmem>>, vector<32x32xbf16>
    %10 = arith.truncf %8 : vector<16x32xf32> to vector<16x32xbf16>
    %cst_7 = arith.constant dense<0.000000e+00> : vector<16x32xf32>
    %11 = tpu.matmul %10, %9, %cst_7 {dimension_numbers = #tpu.dot_dimension_numbers<[1], [0], [0], [1], [0, 0, 1, 1], [], []>} : vector<16x32xbf16>, vector<32x32xbf16>, vector<16x32xf32> -> vector<16x32xf32>
    %c1 = arith.constant 1 : index
    %c0_8 = arith.constant 0 : index
    %12 = vector.load %arg1[%c1, %c0_8] : memref<24x128xf32, #tpu.memory_space<vmem>>, vector<1x32xf32>
    %13 = vector.broadcast %12 : vector<1x32xf32> to vector<16x32xf32>
    %14 = arith.addf %11, %13 : vector<16x32xf32>
    %15 = tpu.iota {dimensions = array<i32: 0>} : vector<16x16xi32>
    %16 = tpu.iota {dimensions = array<i32: 1>} : vector<16x16xi32>
    %17 = arith.cmpi sle, %16, %15 : vector<16x16xi32>
    %18 = tpu.iota {dimensions = array<i32: 0>} : vector<16x1xi32>
    %19 = tpu.iota {dimensions = array<i32: 1>} : vector<1x64xi32>
    %c2 = arith.constant 2 : index
    %c0_9 = arith.constant 0 : index
    %20 = vector.load %arg1[%c2, %c0_9] : memref<24x128xf32, #tpu.memory_space<vmem>>, vector<1x32xf32>
    %21 = arith.mulf %14, %14 : vector<16x32xf32>
    %cst_10 = arith.constant dense<0.000000e+00> : vector<16xf32>
    %22 = vector.multi_reduction <add>, %21, %cst_10 [1] : vector<16x32xf32> to vector<16xf32>
    %23 = vector.shape_cast %22 : vector<16xf32> to vector<16x1xf32>
    %cst_11 = arith.constant 3.200000e+01 : f32
    %24 = vector.broadcast %cst_11 : f32 to vector<16x1xf32>
    %25 = arith.divf %23, %24 : vector<16x1xf32>
    %cst_12 = arith.constant 9.99999974E-6 : f32
    %26 = vector.broadcast %cst_12 : f32 to vector<16x1xf32>
    %27 = arith.addf %25, %26 : vector<16x1xf32>
    %28 = math.rsqrt %27 : vector<16x1xf32>
    %29 = vector.broadcast %28 : vector<16x1xf32> to vector<16x32xf32>
    %30 = arith.mulf %14, %29 : vector<16x32xf32>
    %31 = vector.broadcast %20 : vector<1x32xf32> to vector<16x32xf32>
    %32 = arith.mulf %30, %31 : vector<16x32xf32>
    %c0_13 = arith.constant 0 : index
    %c0_14 = arith.constant 0 : index
    %33 = vector.load %arg3[%c0_13, %c0_14] : memref<64x192xbf16, #tpu.memory_space<vmem>>, vector<32x192xbf16>
    %34 = arith.truncf %32 : vector<16x32xf32> to vector<16x32xbf16>
    %cst_15 = arith.constant dense<0.000000e+00> : vector<16x192xf32>
    %35 = tpu.matmul %34, %33, %cst_15 {dimension_numbers = #tpu.dot_dimension_numbers<[1], [0], [0], [1], [0, 0, 1, 1], [], []>} : vector<16x32xbf16>, vector<32x192xbf16>, vector<16x192xf32> -> vector<16x192xf32>
    %36 = vector.extract_strided_slice %35 {offsets = [0, 0], sizes = [16, 96], strides = [1, 1]} : vector<16x192xf32> to vector<16x96xf32>
    %37 = vector.extract_strided_slice %35 {offsets = [0, 96], sizes = [16, 2], strides = [1, 1]} : vector<16x192xf32> to vector<16x2xf32>
    %38 = vector.extract_strided_slice %35 {offsets = [0, 128], sizes = [16, 64], strides = [1, 1]} : vector<16x192xf32> to vector<16x64xf32>
    %c22 = arith.constant 22 : index
    %c0_16 = arith.constant 0 : index
    %39 = vector.load %arg1[%c22, %c0_16] : memref<24x128xf32, #tpu.memory_space<vmem>>, vector<1x96xf32>
    %40 = vector.broadcast %39 : vector<1x96xf32> to vector<16x96xf32>
    %41 = arith.mulf %36, %40 : vector<16x96xf32>
    %c3_i32 = arith.constant 3 : i32
    %42 = vector.broadcast %c3_i32 : i32 to vector<16x1xi32>
    %43 = arith.cmpi sge, %18, %42 : vector<16x1xi32>
    %c3_i32_17 = arith.constant 3 : i32
    %44 = tpu.dynamic_rotate %36 by %c3_i32_17 dim 0 : vector<16x96xf32>, i32 -> vector<16x96xf32>
    %cst_18 = arith.constant 0.000000e+00 : f32
    %45 = vector.shape_cast %43 : vector<16x1xi1> to vector<16x1xi1>
    %46 = vector.broadcast %45 : vector<16x1xi1> to vector<16x96xi1>
    %47 = vector.broadcast %cst_18 : f32 to vector<16x96xf32>
    %48 = arith.select %46, %44, %47 : vector<16x96xi1>, vector<16x96xf32>
    %c19 = arith.constant 19 : index
    %c0_19 = arith.constant 0 : index
    %49 = vector.load %arg1[%c19, %c0_19] : memref<24x128xf32, #tpu.memory_space<vmem>>, vector<1x96xf32>
    %50 = vector.broadcast %49 : vector<1x96xf32> to vector<16x96xf32>
    %51 = arith.mulf %48, %50 : vector<16x96xf32>
    %52 = arith.addf %41, %51 : vector<16x96xf32>
    %c2_i32 = arith.constant 2 : i32
    %53 = vector.broadcast %c2_i32 : i32 to vector<16x1xi32>
    %54 = arith.cmpi sge, %18, %53 : vector<16x1xi32>
    %c2_i32_20 = arith.constant 2 : i32
    %55 = tpu.dynamic_rotate %36 by %c2_i32_20 dim 0 : vector<16x96xf32>, i32 -> vector<16x96xf32>
    %cst_21 = arith.constant 0.000000e+00 : f32
    %56 = vector.shape_cast %54 : vector<16x1xi1> to vector<16x1xi1>
    %57 = vector.broadcast %56 : vector<16x1xi1> to vector<16x96xi1>
    %58 = vector.broadcast %cst_21 : f32 to vector<16x96xf32>
    %59 = arith.select %57, %55, %58 : vector<16x96xi1>, vector<16x96xf32>
    %c20 = arith.constant 20 : index
    %c0_22 = arith.constant 0 : index
    %60 = vector.load %arg1[%c20, %c0_22] : memref<24x128xf32, #tpu.memory_space<vmem>>, vector<1x96xf32>
    %61 = vector.broadcast %60 : vector<1x96xf32> to vector<16x96xf32>
    %62 = arith.mulf %59, %61 : vector<16x96xf32>
    %63 = arith.addf %52, %62 : vector<16x96xf32>
    %c1_i32 = arith.constant 1 : i32
    %64 = vector.broadcast %c1_i32 : i32 to vector<16x1xi32>
    %65 = arith.cmpi sge, %18, %64 : vector<16x1xi32>
    %c1_i32_23 = arith.constant 1 : i32
    %66 = tpu.dynamic_rotate %36 by %c1_i32_23 dim 0 : vector<16x96xf32>, i32 -> vector<16x96xf32>
    %cst_24 = arith.constant 0.000000e+00 : f32
    %67 = vector.shape_cast %65 : vector<16x1xi1> to vector<16x1xi1>
    %68 = vector.broadcast %67 : vector<16x1xi1> to vector<16x96xi1>
    %69 = vector.broadcast %cst_24 : f32 to vector<16x96xf32>
    %70 = arith.select %68, %66, %69 : vector<16x96xi1>, vector<16x96xf32>
    %c21 = arith.constant 21 : index
    %c0_25 = arith.constant 0 : index
    %71 = vector.load %arg1[%c21, %c0_25] : memref<24x128xf32, #tpu.memory_space<vmem>>, vector<1x96xf32>
    %72 = vector.broadcast %71 : vector<1x96xf32> to vector<16x96xf32>
    %73 = arith.mulf %70, %72 : vector<16x96xf32>
    %74 = arith.addf %63, %73 : vector<16x96xf32>
    %c4 = arith.constant 4 : index
    %c0_26 = arith.constant 0 : index
    %75 = vector.load %arg1[%c4, %c0_26] : memref<24x128xf32, #tpu.memory_space<vmem>>, vector<1x96xf32>
    %76 = vector.broadcast %75 : vector<1x96xf32> to vector<16x96xf32>
    %77 = arith.addf %74, %76 : vector<16x96xf32>
    %78 = arith.negf %77 : vector<16x96xf32>
    %79 = math.exp %78 : vector<16x96xf32>
    %cst_27 = arith.constant 1.000000e+00 : f32
    %80 = vector.broadcast %cst_27 : f32 to vector<16x96xf32>
    %81 = arith.addf %80, %79 : vector<16x96xf32>
    %82 = arith.divf %80, %81 : vector<16x96xf32>
    %83 = arith.mulf %77, %82 : vector<16x96xf32>
    %84 = vector.extract_strided_slice %83 {offsets = [0, 0], sizes = [16, 64], strides = [1, 1]} : vector<16x96xf32> to vector<16x64xf32>
    %85 = vector.extract_strided_slice %83 {offsets = [0, 64], sizes = [16, 16], strides = [1, 1]} : vector<16x96xf32> to vector<16x16xf32>
    %86 = vector.extract_strided_slice %83 {offsets = [0, 80], sizes = [16, 16], strides = [1, 1]} : vector<16x96xf32> to vector<16x16xf32>
    %cst_28 = arith.constant dense<0.000000e+00> : vector<16x16xf32>
    %87 = tpu.matmul %86, %85, %cst_28 {dimension_numbers = #tpu.dot_dimension_numbers<[1], [1], [0], [0], [0, 0, 1, 0], [], []>} : vector<16x16xf32>, vector<16x16xf32>, vector<16x16xf32> -> vector<16x16xf32>
    %cst_29 = arith.constant 0.000000e+00 : f32
    %88 = vector.broadcast %cst_29 : f32 to vector<16x16xf32>
    %89 = arith.select %17, %87, %88 : vector<16x16xi1>, vector<16x16xf32>
    %c7 = arith.constant 7 : index
    %c0_30 = arith.constant 0 : index
    %90 = vector.load %arg1[%c7, %c0_30] : memref<24x128xf32, #tpu.memory_space<vmem>>, vector<1x2xf32>
    %91 = vector.broadcast %90 : vector<1x2xf32> to vector<16x2xf32>
    %92 = arith.addf %37, %91 : vector<16x2xf32>
    %cst_31 = arith.constant 2.000000e+01 : f32
    %93 = vector.broadcast %cst_31 : f32 to vector<16x2xf32>
    %94 = arith.cmpf ogt, %92, %93 : vector<16x2xf32>
    %cst_32 = arith.constant 2.000000e+01 : f32
    %95 = vector.broadcast %cst_32 : f32 to vector<16x2xf32>
    %96 = arith.minimumf %92, %95 : vector<16x2xf32>
    %97 = math.exp %96 : vector<16x2xf32>
    %cst_33 = arith.constant 1.000000e+00 : f32
    %98 = vector.broadcast %cst_33 : f32 to vector<16x2xf32>
    %99 = arith.addf %98, %97 : vector<16x2xf32>
    %100 = math.log %99 : vector<16x2xf32>
    %101 = arith.select %94, %92, %100 : vector<16x2xi1>, vector<16x2xf32>
    %c8 = arith.constant 8 : index
    %c0_34 = arith.constant 0 : index
    %102 = vector.load %arg1[%c8, %c0_34] : memref<24x128xf32, #tpu.memory_space<vmem>>, vector<1x2xf32>
    %103 = vector.broadcast %102 : vector<1x2xf32> to vector<16x2xf32>
    %104 = arith.mulf %101, %103 : vector<16x2xf32>
    %c1_i32_35 = arith.constant 1 : i32
    %105 = vector.broadcast %c1_i32_35 : i32 to vector<16x1xi32>
    %106 = arith.cmpi sge, %18, %105 : vector<16x1xi32>
    %c1_i32_36 = arith.constant 1 : i32
    %107 = tpu.dynamic_rotate %104 by %c1_i32_36 dim 0 : vector<16x2xf32>, i32 -> vector<16x2xf32>
    %cst_37 = arith.constant 0.000000e+00 : f32
    %108 = vector.shape_cast %106 : vector<16x1xi1> to vector<16x1xi1>
    %109 = vector.broadcast %108 : vector<16x1xi1> to vector<16x2xi1>
    %110 = vector.broadcast %cst_37 : f32 to vector<16x2xf32>
    %111 = arith.select %109, %107, %110 : vector<16x2xi1>, vector<16x2xf32>
    %112 = arith.addf %104, %111 : vector<16x2xf32>
    %c2_i32_38 = arith.constant 2 : i32
    %113 = vector.broadcast %c2_i32_38 : i32 to vector<16x1xi32>
    %114 = arith.cmpi sge, %18, %113 : vector<16x1xi32>
    %c2_i32_39 = arith.constant 2 : i32
    %115 = tpu.dynamic_rotate %112 by %c2_i32_39 dim 0 : vector<16x2xf32>, i32 -> vector<16x2xf32>
    %cst_40 = arith.constant 0.000000e+00 : f32
    %116 = vector.shape_cast %114 : vector<16x1xi1> to vector<16x1xi1>
    %117 = vector.broadcast %116 : vector<16x1xi1> to vector<16x2xi1>
    %118 = vector.broadcast %cst_40 : f32 to vector<16x2xf32>
    %119 = arith.select %117, %115, %118 : vector<16x2xi1>, vector<16x2xf32>
    %120 = arith.addf %112, %119 : vector<16x2xf32>
    %c4_i32 = arith.constant 4 : i32
    %121 = vector.broadcast %c4_i32 : i32 to vector<16x1xi32>
    %122 = arith.cmpi sge, %18, %121 : vector<16x1xi32>
    %c4_i32_41 = arith.constant 4 : i32
    %123 = tpu.dynamic_rotate %120 by %c4_i32_41 dim 0 : vector<16x2xf32>, i32 -> vector<16x2xf32>
    %cst_42 = arith.constant 0.000000e+00 : f32
    %124 = vector.shape_cast %122 : vector<16x1xi1> to vector<16x1xi1>
    %125 = vector.broadcast %124 : vector<16x1xi1> to vector<16x2xi1>
    %126 = vector.broadcast %cst_42 : f32 to vector<16x2xf32>
    %127 = arith.select %125, %123, %126 : vector<16x2xi1>, vector<16x2xf32>
    %128 = arith.addf %120, %127 : vector<16x2xf32>
    %c8_i32 = arith.constant 8 : i32
    %129 = vector.broadcast %c8_i32 : i32 to vector<16x1xi32>
    %130 = arith.cmpi sge, %18, %129 : vector<16x1xi32>
    %c8_i32_43 = arith.constant 8 : i32
    %131 = tpu.dynamic_rotate %128 by %c8_i32_43 dim 0 : vector<16x2xf32>, i32 -> vector<16x2xf32>
    %cst_44 = arith.constant 0.000000e+00 : f32
    %132 = vector.shape_cast %130 : vector<16x1xi1> to vector<16x1xi1>
    %133 = vector.broadcast %132 : vector<16x1xi1> to vector<16x2xi1>
    %134 = vector.broadcast %cst_44 : f32 to vector<16x2xf32>
    %135 = arith.select %133, %131, %134 : vector<16x2xi1>, vector<16x2xf32>
    %136 = arith.addf %128, %135 : vector<16x2xf32>
    %cst_45 = arith.constant 1.000000e+00 : f32
    %137 = vector.broadcast %cst_45 : f32 to vector<16x1xf32>
    %138 = vector.extract_strided_slice %136 {offsets = [0, 0], sizes = [16, 1], strides = [1, 1]} : vector<16x2xf32> to vector<16x1xf32>
    %cst_46 = arith.constant dense<0.000000e+00> : vector<16x16xf32>
    %139 = tpu.matmul %137, %138, %cst_46 {dimension_numbers = #tpu.dot_dimension_numbers<[1], [1], [0], [0], [0, 0, 1, 0], [], []>} : vector<16x1xf32>, vector<16x1xf32>, vector<16x16xf32> -> vector<16x16xf32>
    %140 = vector.broadcast %138 : vector<16x1xf32> to vector<16x16xf32>
    %141 = arith.subf %140, %139 : vector<16x16xf32>
    %cst_47 = arith.constant -1.000000e+30 : f32
    %142 = vector.broadcast %cst_47 : f32 to vector<16x16xf32>
    %143 = arith.select %17, %141, %142 : vector<16x16xi1>, vector<16x16xf32>
    %144 = math.exp %143 : vector<16x16xf32>
    %145 = arith.mulf %144, %89 : vector<16x16xf32>
    %c0_i32 = arith.constant 0 : i32
    %146 = vector.broadcast %c0_i32 : i32 to vector<1x64xi32>
    %147 = arith.cmpi sge, %19, %146 : vector<1x64xi32>
    %c32_i32 = arith.constant 32 : i32
    %148 = vector.broadcast %c32_i32 : i32 to vector<1x64xi32>
    %149 = arith.cmpi slt, %19, %148 : vector<1x64xi32>
    %150 = arith.andi %147, %149 : vector<1x64xi1>
    %151 = vector.extract_strided_slice %101 {offsets = [0, 0], sizes = [16, 1], strides = [1, 1]} : vector<16x2xf32> to vector<16x1xf32>
    %152 = vector.broadcast %151 : vector<16x1xf32> to vector<16x64xf32>
    %153 = arith.mulf %84, %152 : vector<16x64xf32>
    %cst_48 = arith.constant 0.000000e+00 : f32
    %154 = vector.shape_cast %150 : vector<1x64xi1> to vector<1x64xi1>
    %155 = vector.broadcast %154 : vector<1x64xi1> to vector<16x64xi1>
    %156 = vector.broadcast %cst_48 : f32 to vector<16x64xf32>
    %157 = arith.select %155, %153, %156 : vector<16x64xi1>, vector<16x64xf32>
    %158 = vector.extract_strided_slice %136 {offsets = [0, 1], sizes = [16, 1], strides = [1, 1]} : vector<16x2xf32> to vector<16x1xf32>
    %cst_49 = arith.constant dense<0.000000e+00> : vector<16x16xf32>
    %159 = tpu.matmul %137, %158, %cst_49 {dimension_numbers = #tpu.dot_dimension_numbers<[1], [1], [0], [0], [0, 0, 1, 0], [], []>} : vector<16x1xf32>, vector<16x1xf32>, vector<16x16xf32> -> vector<16x16xf32>
    %160 = vector.broadcast %158 : vector<16x1xf32> to vector<16x16xf32>
    %161 = arith.subf %160, %159 : vector<16x16xf32>
    %cst_50 = arith.constant -1.000000e+30 : f32
    %162 = vector.broadcast %cst_50 : f32 to vector<16x16xf32>
    %163 = arith.select %17, %161, %162 : vector<16x16xi1>, vector<16x16xf32>
    %164 = math.exp %163 : vector<16x16xf32>
    %165 = arith.mulf %164, %89 : vector<16x16xf32>
    %c32_i32_51 = arith.constant 32 : i32
    %166 = vector.broadcast %c32_i32_51 : i32 to vector<1x64xi32>
    %167 = arith.cmpi sge, %19, %166 : vector<1x64xi32>
    %c64_i32 = arith.constant 64 : i32
    %168 = vector.broadcast %c64_i32 : i32 to vector<1x64xi32>
    %169 = arith.cmpi slt, %19, %168 : vector<1x64xi32>
    %170 = arith.andi %167, %169 : vector<1x64xi1>
    %171 = vector.extract_strided_slice %101 {offsets = [0, 1], sizes = [16, 1], strides = [1, 1]} : vector<16x2xf32> to vector<16x1xf32>
    %172 = vector.broadcast %171 : vector<16x1xf32> to vector<16x64xf32>
    %173 = arith.mulf %84, %172 : vector<16x64xf32>
    %cst_52 = arith.constant 0.000000e+00 : f32
    %174 = vector.shape_cast %170 : vector<1x64xi1> to vector<1x64xi1>
    %175 = vector.broadcast %174 : vector<1x64xi1> to vector<16x64xi1>
    %176 = vector.broadcast %cst_52 : f32 to vector<16x64xf32>
    %177 = arith.select %175, %173, %176 : vector<16x64xi1>, vector<16x64xf32>
    %178 = tpu.concatenate %145, %165 in 1 : vector<16x16xf32>, vector<16x16xf32> -> vector<16x32xf32>
    %179 = tpu.concatenate %157, %177 in 0 : vector<16x64xf32>, vector<16x64xf32> -> vector<32x64xf32>
    %c9 = arith.constant 9 : index
    %c0_53 = arith.constant 0 : index
    %180 = vector.load %arg1[%c9, %c0_53] : memref<24x128xf32, #tpu.memory_space<vmem>>, vector<1x64xf32>
    %181 = vector.broadcast %180 : vector<1x64xf32> to vector<16x64xf32>
    %182 = arith.mulf %84, %181 : vector<16x64xf32>
    %cst_54 = arith.constant dense<0.000000e+00> : vector<16x64xf32>
    %183 = tpu.matmul %178, %179, %cst_54 {dimension_numbers = #tpu.dot_dimension_numbers<[1], [0], [0], [1], [0, 0, 1, 1], [], []>} : vector<16x32xf32>, vector<32x64xf32>, vector<16x64xf32> -> vector<16x64xf32>
    %184 = arith.addf %182, %183 : vector<16x64xf32>
    %185 = arith.negf %38 : vector<16x64xf32>
    %186 = math.exp %185 : vector<16x64xf32>
    %cst_55 = arith.constant 1.000000e+00 : f32
    %187 = vector.broadcast %cst_55 : f32 to vector<16x64xf32>
    %188 = arith.addf %187, %186 : vector<16x64xf32>
    %189 = arith.divf %187, %188 : vector<16x64xf32>
    %190 = arith.mulf %38, %189 : vector<16x64xf32>
    %191 = arith.mulf %184, %190 : vector<16x64xf32>
    %c5 = arith.constant 5 : index
    %c0_56 = arith.constant 0 : index
    %192 = vector.load %arg1[%c5, %c0_56] : memref<24x128xf32, #tpu.memory_space<vmem>>, vector<1x64xf32>
    %193 = arith.mulf %191, %191 : vector<16x64xf32>
    %cst_57 = arith.constant dense<0.000000e+00> : vector<16xf32>
    %194 = vector.multi_reduction <add>, %193, %cst_57 [1] : vector<16x64xf32> to vector<16xf32>
    %195 = vector.shape_cast %194 : vector<16xf32> to vector<16x1xf32>
    %cst_58 = arith.constant 6.400000e+01 : f32
    %196 = vector.broadcast %cst_58 : f32 to vector<16x1xf32>
    %197 = arith.divf %195, %196 : vector<16x1xf32>
    %cst_59 = arith.constant 9.99999974E-6 : f32
    %198 = vector.broadcast %cst_59 : f32 to vector<16x1xf32>
    %199 = arith.addf %197, %198 : vector<16x1xf32>
    %200 = math.rsqrt %199 : vector<16x1xf32>
    %201 = vector.broadcast %200 : vector<16x1xf32> to vector<16x64xf32>
    %202 = arith.mulf %191, %201 : vector<16x64xf32>
    %203 = vector.broadcast %192 : vector<1x64xf32> to vector<16x64xf32>
    %204 = arith.mulf %202, %203 : vector<16x64xf32>
    %c80 = arith.constant 80 : index
    %c0_60 = arith.constant 0 : index
    %205 = vector.load %arg2[%c80, %c0_60] : memref<272x32xbf16, #tpu.memory_space<vmem>>, vector<64x32xbf16>
    %206 = arith.truncf %204 : vector<16x64xf32> to vector<16x64xbf16>
    %cst_61 = arith.constant dense<0.000000e+00> : vector<16x32xf32>
    %207 = tpu.matmul %206, %205, %cst_61 {dimension_numbers = #tpu.dot_dimension_numbers<[1], [0], [0], [1], [0, 0, 1, 1], [], []>} : vector<16x64xbf16>, vector<64x32xbf16>, vector<16x32xf32> -> vector<16x32xf32>
    %208 = arith.addf %14, %207 : vector<16x32xf32>
    %c3 = arith.constant 3 : index
    %c0_62 = arith.constant 0 : index
    %209 = vector.load %arg1[%c3, %c0_62] : memref<24x128xf32, #tpu.memory_space<vmem>>, vector<1x32xf32>
    %210 = arith.mulf %208, %208 : vector<16x32xf32>
    %cst_63 = arith.constant dense<0.000000e+00> : vector<16xf32>
    %211 = vector.multi_reduction <add>, %210, %cst_63 [1] : vector<16x32xf32> to vector<16xf32>
    %212 = vector.shape_cast %211 : vector<16xf32> to vector<16x1xf32>
    %cst_64 = arith.constant 3.200000e+01 : f32
    %213 = vector.broadcast %cst_64 : f32 to vector<16x1xf32>
    %214 = arith.divf %212, %213 : vector<16x1xf32>
    %cst_65 = arith.constant 9.99999974E-6 : f32
    %215 = vector.broadcast %cst_65 : f32 to vector<16x1xf32>
    %216 = arith.addf %214, %215 : vector<16x1xf32>
    %217 = math.rsqrt %216 : vector<16x1xf32>
    %218 = vector.broadcast %217 : vector<16x1xf32> to vector<16x32xf32>
    %219 = arith.mulf %208, %218 : vector<16x32xf32>
    %220 = vector.broadcast %209 : vector<1x32xf32> to vector<16x32xf32>
    %221 = arith.mulf %219, %220 : vector<16x32xf32>
    %c48 = arith.constant 48 : index
    %c0_66 = arith.constant 0 : index
    %222 = vector.load %arg2[%c48, %c0_66] : memref<272x32xbf16, #tpu.memory_space<vmem>>, vector<32x32xbf16>
    %223 = arith.truncf %221 : vector<16x32xf32> to vector<16x32xbf16>
    %cst_67 = arith.constant dense<0.000000e+00> : vector<16x32xf32>
    %224 = tpu.matmul %223, %222, %cst_67 {dimension_numbers = #tpu.dot_dimension_numbers<[1], [0], [0], [1], [0, 0, 1, 1], [], []>} : vector<16x32xbf16>, vector<32x32xbf16>, vector<16x32xf32> -> vector<16x32xf32>
    %c32 = arith.constant 32 : index
    %c0_68 = arith.constant 0 : index
    %225 = vector.load %arg3[%c32, %c0_68] : memref<64x192xbf16, #tpu.memory_space<vmem>>, vector<32x128xbf16>
    %226 = arith.truncf %224 : vector<16x32xf32> to vector<16x32xbf16>
    %cst_69 = arith.constant dense<0.000000e+00> : vector<16x128xf32>
    %227 = tpu.matmul %226, %225, %cst_69 {dimension_numbers = #tpu.dot_dimension_numbers<[1], [0], [0], [1], [0, 0, 1, 1], [], []>} : vector<16x32xbf16>, vector<32x128xbf16>, vector<16x128xf32> -> vector<16x128xf32>
    %c10 = arith.constant 10 : index
    %c0_70 = arith.constant 0 : index
    %228 = vector.load %arg1[%c10, %c0_70] : memref<24x128xf32, #tpu.memory_space<vmem>>, vector<1x128xf32>
    %229 = vector.broadcast %228 : vector<1x128xf32> to vector<16x128xf32>
    %230 = arith.addf %227, %229 : vector<16x128xf32>
    %c11 = arith.constant 11 : index
    %c0_71 = arith.constant 0 : index
    %231 = vector.load %arg1[%c11, %c0_71] : memref<24x128xf32, #tpu.memory_space<vmem>>, vector<1x128xf32>
    %c12 = arith.constant 12 : index
    %c0_72 = arith.constant 0 : index
    %232 = vector.load %arg1[%c12, %c0_72] : memref<24x128xf32, #tpu.memory_space<vmem>>, vector<1x128xf32>
    %cst_73 = arith.constant dense<0.000000e+00> : vector<16xf32>
    %233 = vector.multi_reduction <add>, %230, %cst_73 [1] : vector<16x128xf32> to vector<16xf32>
    %234 = vector.shape_cast %233 : vector<16xf32> to vector<16x1xf32>
    %cst_74 = arith.constant 1.280000e+02 : f32
    %235 = vector.broadcast %cst_74 : f32 to vector<16x1xf32>
    %236 = arith.divf %234, %235 : vector<16x1xf32>
    %237 = vector.broadcast %236 : vector<16x1xf32> to vector<16x128xf32>
    %238 = arith.subf %230, %237 : vector<16x128xf32>
    %239 = arith.mulf %238, %238 : vector<16x128xf32>
    %cst_75 = arith.constant dense<0.000000e+00> : vector<16xf32>
    %240 = vector.multi_reduction <add>, %239, %cst_75 [1] : vector<16x128xf32> to vector<16xf32>
    %241 = vector.shape_cast %240 : vector<16xf32> to vector<16x1xf32>
    %cst_76 = arith.constant 1.280000e+02 : f32
    %242 = vector.broadcast %cst_76 : f32 to vector<16x1xf32>
    %243 = arith.divf %241, %242 : vector<16x1xf32>
    %cst_77 = arith.constant 9.99999974E-6 : f32
    %244 = vector.broadcast %cst_77 : f32 to vector<16x1xf32>
    %245 = arith.addf %243, %244 : vector<16x1xf32>
    %246 = math.rsqrt %245 : vector<16x1xf32>
    %247 = vector.broadcast %246 : vector<16x1xf32> to vector<16x128xf32>
    %248 = arith.mulf %238, %247 : vector<16x128xf32>
    %249 = vector.broadcast %231 : vector<1x128xf32> to vector<16x128xf32>
    %250 = arith.mulf %248, %249 : vector<16x128xf32>
    %251 = vector.broadcast %232 : vector<1x128xf32> to vector<16x128xf32>
    %252 = arith.addf %250, %251 : vector<16x128xf32>
    %cst_78 = arith.constant 0.000000e+00 : f32
    %253 = vector.broadcast %cst_78 : f32 to vector<16x128xf32>
    %254 = arith.maximumf %252, %253 : vector<16x128xf32>
    %c0_79 = arith.constant 0 : index
    %c0_80 = arith.constant 0 : index
    %255 = vector.load %arg4[%c0_79, %c0_80] : memref<128x256xbf16, #tpu.memory_space<vmem>>, vector<128x128xbf16>
    %256 = arith.truncf %254 : vector<16x128xf32> to vector<16x128xbf16>
    %cst_81 = arith.constant dense<0.000000e+00> : vector<16x128xf32>
    %257 = tpu.matmul %256, %255, %cst_81 {dimension_numbers = #tpu.dot_dimension_numbers<[1], [0], [0], [1], [0, 0, 1, 1], [], []>} : vector<16x128xbf16>, vector<128x128xbf16>, vector<16x128xf32> -> vector<16x128xf32>
    %c13 = arith.constant 13 : index
    %c0_82 = arith.constant 0 : index
    %258 = vector.load %arg1[%c13, %c0_82] : memref<24x128xf32, #tpu.memory_space<vmem>>, vector<1x128xf32>
    %259 = vector.broadcast %258 : vector<1x128xf32> to vector<16x128xf32>
    %260 = arith.addf %257, %259 : vector<16x128xf32>
    %c14 = arith.constant 14 : index
    %c0_83 = arith.constant 0 : index
    %261 = vector.load %arg1[%c14, %c0_83] : memref<24x128xf32, #tpu.memory_space<vmem>>, vector<1x128xf32>
    %c15 = arith.constant 15 : index
    %c0_84 = arith.constant 0 : index
    %262 = vector.load %arg1[%c15, %c0_84] : memref<24x128xf32, #tpu.memory_space<vmem>>, vector<1x128xf32>
    %cst_85 = arith.constant dense<0.000000e+00> : vector<16xf32>
    %263 = vector.multi_reduction <add>, %260, %cst_85 [1] : vector<16x128xf32> to vector<16xf32>
    %264 = vector.shape_cast %263 : vector<16xf32> to vector<16x1xf32>
    %cst_86 = arith.constant 1.280000e+02 : f32
    %265 = vector.broadcast %cst_86 : f32 to vector<16x1xf32>
    %266 = arith.divf %264, %265 : vector<16x1xf32>
    %267 = vector.broadcast %266 : vector<16x1xf32> to vector<16x128xf32>
    %268 = arith.subf %260, %267 : vector<16x128xf32>
    %269 = arith.mulf %268, %268 : vector<16x128xf32>
    %cst_87 = arith.constant dense<0.000000e+00> : vector<16xf32>
    %270 = vector.multi_reduction <add>, %269, %cst_87 [1] : vector<16x128xf32> to vector<16xf32>
    %271 = vector.shape_cast %270 : vector<16xf32> to vector<16x1xf32>
    %cst_88 = arith.constant 1.280000e+02 : f32
    %272 = vector.broadcast %cst_88 : f32 to vector<16x1xf32>
    %273 = arith.divf %271, %272 : vector<16x1xf32>
    %cst_89 = arith.constant 9.99999974E-6 : f32
    %274 = vector.broadcast %cst_89 : f32 to vector<16x1xf32>
    %275 = arith.addf %273, %274 : vector<16x1xf32>
    %276 = math.rsqrt %275 : vector<16x1xf32>
    %277 = vector.broadcast %276 : vector<16x1xf32> to vector<16x128xf32>
    %278 = arith.mulf %268, %277 : vector<16x128xf32>
    %279 = vector.broadcast %261 : vector<1x128xf32> to vector<16x128xf32>
    %280 = arith.mulf %278, %279 : vector<16x128xf32>
    %281 = vector.broadcast %262 : vector<1x128xf32> to vector<16x128xf32>
    %282 = arith.addf %280, %281 : vector<16x128xf32>
    %cst_90 = arith.constant 0.000000e+00 : f32
    %283 = vector.broadcast %cst_90 : f32 to vector<16x128xf32>
    %284 = arith.maximumf %282, %283 : vector<16x128xf32>
    %c0_91 = arith.constant 0 : index
    %c128 = arith.constant 128 : index
    %285 = vector.load %arg4[%c0_91, %c128] : memref<128x256xbf16, #tpu.memory_space<vmem>>, vector<128x128xbf16>
    %286 = arith.truncf %284 : vector<16x128xf32> to vector<16x128xbf16>
    %cst_92 = arith.constant dense<0.000000e+00> : vector<16x128xf32>
    %287 = tpu.matmul %286, %285, %cst_92 {dimension_numbers = #tpu.dot_dimension_numbers<[1], [0], [0], [1], [0, 0, 1, 1], [], []>} : vector<16x128xbf16>, vector<128x128xbf16>, vector<16x128xf32> -> vector<16x128xf32>
    %c16_93 = arith.constant 16 : index
    %c0_94 = arith.constant 0 : index
    %288 = vector.load %arg1[%c16_93, %c0_94] : memref<24x128xf32, #tpu.memory_space<vmem>>, vector<1x128xf32>
    %289 = vector.broadcast %288 : vector<1x128xf32> to vector<16x128xf32>
    %290 = arith.addf %287, %289 : vector<16x128xf32>
    %c17 = arith.constant 17 : index
    %c0_95 = arith.constant 0 : index
    %291 = vector.load %arg1[%c17, %c0_95] : memref<24x128xf32, #tpu.memory_space<vmem>>, vector<1x128xf32>
    %c18 = arith.constant 18 : index
    %c0_96 = arith.constant 0 : index
    %292 = vector.load %arg1[%c18, %c0_96] : memref<24x128xf32, #tpu.memory_space<vmem>>, vector<1x128xf32>
    %cst_97 = arith.constant dense<0.000000e+00> : vector<16xf32>
    %293 = vector.multi_reduction <add>, %290, %cst_97 [1] : vector<16x128xf32> to vector<16xf32>
    %294 = vector.shape_cast %293 : vector<16xf32> to vector<16x1xf32>
    %cst_98 = arith.constant 1.280000e+02 : f32
    %295 = vector.broadcast %cst_98 : f32 to vector<16x1xf32>
    %296 = arith.divf %294, %295 : vector<16x1xf32>
    %297 = vector.broadcast %296 : vector<16x1xf32> to vector<16x128xf32>
    %298 = arith.subf %290, %297 : vector<16x128xf32>
    %299 = arith.mulf %298, %298 : vector<16x128xf32>
    %cst_99 = arith.constant dense<0.000000e+00> : vector<16xf32>
    %300 = vector.multi_reduction <add>, %299, %cst_99 [1] : vector<16x128xf32> to vector<16xf32>
    %301 = vector.shape_cast %300 : vector<16xf32> to vector<16x1xf32>
    %cst_100 = arith.constant 1.280000e+02 : f32
    %302 = vector.broadcast %cst_100 : f32 to vector<16x1xf32>
    %303 = arith.divf %301, %302 : vector<16x1xf32>
    %cst_101 = arith.constant 9.99999974E-6 : f32
    %304 = vector.broadcast %cst_101 : f32 to vector<16x1xf32>
    %305 = arith.addf %303, %304 : vector<16x1xf32>
    %306 = math.rsqrt %305 : vector<16x1xf32>
    %307 = vector.broadcast %306 : vector<16x1xf32> to vector<16x128xf32>
    %308 = arith.mulf %298, %307 : vector<16x128xf32>
    %309 = vector.broadcast %291 : vector<1x128xf32> to vector<16x128xf32>
    %310 = arith.mulf %308, %309 : vector<16x128xf32>
    %311 = vector.broadcast %292 : vector<1x128xf32> to vector<16x128xf32>
    %312 = arith.addf %310, %311 : vector<16x128xf32>
    %cst_102 = arith.constant 0.000000e+00 : f32
    %313 = vector.broadcast %cst_102 : f32 to vector<16x128xf32>
    %314 = arith.maximumf %312, %313 : vector<16x128xf32>
    %c144 = arith.constant 144 : index
    %c0_103 = arith.constant 0 : index
    %315 = vector.load %arg2[%c144, %c0_103] : memref<272x32xbf16, #tpu.memory_space<vmem>>, vector<128x32xbf16>
    %316 = arith.truncf %314 : vector<16x128xf32> to vector<16x128xbf16>
    %cst_104 = arith.constant dense<0.000000e+00> : vector<16x32xf32>
    %317 = tpu.matmul %316, %315, %cst_104 {dimension_numbers = #tpu.dot_dimension_numbers<[1], [0], [0], [1], [0, 0, 1, 1], [], []>} : vector<16x128xbf16>, vector<128x32xbf16>, vector<16x32xf32> -> vector<16x32xf32>
    %318 = arith.addf %224, %317 : vector<16x32xf32>
    %c6 = arith.constant 6 : index
    %c0_105 = arith.constant 0 : index
    %319 = vector.load %arg1[%c6, %c0_105] : memref<24x128xf32, #tpu.memory_space<vmem>>, vector<1x32xf32>
    %320 = vector.broadcast %319 : vector<1x32xf32> to vector<16x32xf32>
    %321 = arith.addf %318, %320 : vector<16x32xf32>
    %c0_106 = arith.constant 0 : index
    %c0_107 = arith.constant 0 : index
    %322 = vector.load %arg5[%c0_106, %c0_107] : memref<16x32xf32, #tpu.memory_space<vmem>>, vector<16x32xf32>
    tpu.vector_store %arg5[%c0_106, %c0_107], %321 {strides = array<i32>} : memref<16x32xf32, #tpu.memory_space<vmem>>, vector<16x32xf32>,
    return
  }
}

</mosaic_0001>

<llo_original>
// kernel: jamba_forward.1
$region0: #{jamba_forward.1}
  #allocation0 [shape = 'u32[]', space=smem, size = 0x4, offset = 0x4, fixed_abs, tag = 'smem constant byte address 0x4 - core index']
  #allocation1 [shape = 'u32[72,128]{1,0:T(1,128)}', space=vmem, size = 0x9000, scoped, tag = 'internal scratch']
  %s0 = inlined_call_operand.vmem [shape: f32[16,16], index: 0, kind: input, shape index: {}]
  %s1 = inlined_call_operand.hbm [shape: f32[24,128], index: 1, kind: input, shape index: {}]
  %s2 = inlined_call_operand.vmem [shape: bf16[272,32], index: 2, kind: input, shape index: {}]
  %s3 = inlined_call_operand.vmem [shape: bf16[64,192], index: 3, kind: input, shape index: {}]
  %s4 = inlined_call_operand.vmem [shape: bf16[128,256], index: 4, kind: input, shape index: {}]
  %s5 = inlined_call_operand.hbm [shape: f32[16,32], index: 5, kind: output, shape index: {}]
  %s6 = sld [smem:[#allocation0]]
  $region34: #{jamba_forward.1} parent=0
    _
  %s8 = ssub.s32 1, %s6
  %s9 = scalar_select 0, %s8, %s6
  $region1: #{jamba_forward.1} parent=0
    #allocation2 [shape = 'u8[12288]{0}', space=vmem, size = 0x3000, scoped, tag = 'input window, operand 1, single buffered']
    #allocation3 [shape = 's32[1]{0}', space=sflag, size = 0x4, scoped, tag = 'scoped memory for jamba_forward.1']
    #allocation4 [shape = 's32[1]{0}', space=sflag, size = 0x4, scoped, tag = 'scoped memory for jamba_forward.1']
    #allocation5 [shape = 'u8[8192]{0}', space=vmem, size = 0x2000, scoped, tag = 'output window, operand 0, single buffered']
    %10 = vsyncpa [#allocation3], 0
    %11 = vsyncpa [#allocation4], 0
    // Predicated region
    $region2: #{jamba_forward.1} parent=1 // pred_check
      _
    $region3: #{jamba_forward.1} parent=1 // pred_check_branch
      %13 = sbr.rel (0) target = $region5
    $region4: #{jamba_forward.1} parent=1 // pred_region
      _
    $region5: #{jamba_forward.1} parent=1 // pred_fallthru
      _
    // Predicated region
    $region6: #{jamba_forward.1} parent=1 // pred_check
      _
    $region7: #{jamba_forward.1} parent=1 // pred_check_branch
      %15 = sbr.rel (0) target = $region9
    $region8: #{jamba_forward.1} parent=1 // pred_region
      %17 = vsyncadd [#allocation3], 0
      %s18 = sshll.u32 %s1, 4
      %s19 = int_to_ptr.hbm [resolvable:$true] %s18
      %s20 = sshll.u32 [#allocation2], 4
      %s21 = int_to_ptr.vmem [resolvable:$true] %s20
      %26 = dma.hbm_to_vmem [thread:$0]  %s19, 384, %s21, [#allocation3], 128, 128, 8
    $region9: #{jamba_forward.1} parent=1 // pred_fallthru
      _
    // Predicated region
    $region10: #{jamba_forward.1} parent=1 // pred_check
      _
    $region11: #{jamba_forward.1} parent=1 // pred_check_branch
      %28 = sbr.rel (0) target = $region13
    $region12: #{jamba_forward.1} parent=1 // pred_region
      _
    $region13: #{jamba_forward.1} parent=1 // pred_fallthru
      _
    // Predicated region
    $region14: #{jamba_forward.1} parent=1 // pred_check
      _
    $region15: #{jamba_forward.1} parent=1 // pred_check_branch
      %30 = sbr.rel (0) target = $region17
    $region16: #{jamba_forward.1} parent=1 // pred_region
      _
    $region17: #{jamba_forward.1} parent=1 // pred_fallthru
      _
    // Predicated region
    $region18: #{jamba_forward.1} parent=1 // pred_check
      _
    $region19: #{jamba_forward.1} parent=1 // pred_check_branch
      %32 = sbr.rel (0) target = $region21
    $region20: #{jamba_forward.1} parent=1 // pred_region
      _
    $region21: #{jamba_forward.1} parent=1 // pred_fallthru
      _
    // Predicated region
    $region22: #{jamba_forward.1} parent=1 // pred_check
      _
    $region23: #{jamba_forward.1} parent=1 // pred_check_branch
      %34 = sbr.rel (0) target = $region25
    $region24: #{jamba_forward.1} parent=1 // pred_region
      %36 = dma.done [#allocation3], 384
    $region25: #{jamba_forward.1} parent=1 // pred_fallthru
      _
    %v38 = vld [vmem:[%s0] sm:$0xff]
    %v39 = vld [vmem:[%s0 + $0x8] sm:$0xff]
    %v40 = vld [vmem:[%s2] sm:$0xf]
    %v41 = vld [vmem:[%s2 + $0x4] sm:$0xf]
    %v42 = vpack.c.bf16 %v39, %v38
    %v43 = vld [vmem:[#allocation2] sm:$0x1]
    %v44 = vperm.slane %v43, 0
    %v47 = vunpack.c.l.b16 %v40
    %v48 = vunpack.c.l.b16 %v41
    %v49 = vpack.c.b16 %v48, %v47
    %vm51 = vcmask 130048
    %v53 = vsel %vm51, %v42, 0
    %55 = vmatpush.bf16.msra.mxu0 0
    %56 = vmatpush.bf16.msra.mxu0 0
    %57 = vmatpush.bf16.msra.mxu0 0
    %58 = vmatpush.bf16.msra.mxu0 0
    %59 = vmatpush.bf16.msra.mxu0 0
    %60 = vmatpush.bf16.msra.mxu0 0
    %61 = vmatpush.bf16.msra.mxu0 0
    %62 = vmatpush.bf16.msra.mxu0 %v49
    %63 = vmatmul.bf16.gmra.mxu0 %v53
    %v64 = vpop.f32.mrf.mxu0
    %v65 = vadd.f32 %v44, %v64
    %v66 = vpop.f32.mrf.mxu0
    %v67 = vadd.f32 %v44, %v66
    %68 = vdwg.mxu0
    %v69 = vmax.f32 %v65, 0.0
    %v70 = vmax.f32 %v67, 0.0
    %v71 = vld [vmem:[%s2 + $0x8] sm:$0xf]
    %v72 = vld [vmem:[%s2 + $0xc] sm:$0xf]
    %v73 = vld [vmem:[%s2 + $0x10] sm:$0xf]
    %v74 = vld [vmem:[%s2 + $0x14] sm:$0xf]
    %v75 = vpack.c.bf16 %v70, %v69
    %v76 = vld [vmem:[#allocation2 + $0x1] sm:$0x1]
    %v77 = vperm.slane %v76, 0
    %v82 = vunpack.c.l.b16 %v71
    %v83 = vunpack.c.l.b16 %v72
    %v84 = vunpack.c.l.b16 %v73
    %v85 = vunpack.c.l.b16 %v74
    %v86 = vpack.c.b16 %v83, %v82
    %v87 = vpack.c.b16 %v85, %v84
    %vm90 = vcmask 261120
    %v92 = vsel %vm90, %v75, 0
    %94 = vmatpush.bf16.msra.mxu0 0
    %95 = vmatpush.bf16.msra.mxu0 0
    %96 = vmatpush.bf16.msra.mxu0 0
    %97 = vmatpush.bf16.msra.mxu0 0
    %98 = vmatpush.bf16.msra.mxu0 0
    %99 = vmatpush.bf16.msra.mxu0 0
    %100 = vmatpush.bf16.msra.mxu0 %v87
    %101 = vmatpush.bf16.msra.mxu0 %v86
    %102 = vmatmul.bf16.gmra.mxu0 %v92
    %v103 = vpop.f32.mrf.mxu0
    %v104 = vadd.f32 %v77, %v103
    %v105 = vpop.f32.mrf.mxu0
    %v106 = vadd.f32 %v77, %v105
    %107 = vdwg.mxu0
    %v108 = vlaneseq
    %v109 = vshrl.u32 %v108, 7
    %v110 = vadd.s32 %v109, 8
    %v111 = vlaneseq
    %v112 = vand.u32 %v111, 127
    %vm113 = vcmp.le.s32.totalorder %v112, %v109
    %vm114 = vcmp.le.s32.totalorder %v112, %v110
    %v115 = vld [vmem:[#allocation2 + $0x2] sm:$0x1]
    %v116 = vmul.f32 %v104, %v104
    %v117 = vmul.f32 %v106, %v106
    %v118 = vsel %vm90, %v116, 0.0
    %119 = vadd.xlane.f32.xlu0 %v118
    %v120 = vpop.xlane.xlu0 %119
    %v121 = vsel %vm90, %v117, 0.0
    %122 = vadd.xlane.f32.xlu0 %v121
    %v123 = vpop.xlane.xlu0 %122
    %v124 = vrcp.pop 32.0
    %v125 = vmul.f32 32.0, %v124
    %v126 = vsub.f32 1.0, %v125
    %v127 = vmul.f32 %v124, %v126
    %v128 = vadd.f32 %v124, %v127
    %vm129 = vweird.f32 %v124
    %v130 = vsel %vm129, %v124, %v128
    %v131 = vmul.f32 %v120, %v130
    %v132 = vmul.f32 %v123, %v130
    %v133 = vadd.f32 %v131, 1e-05
    %v134 = vadd.f32 %v132, 1e-05
    %v135 = vrsqrt.pop %v133
    %v136 = vmul.f32 %v135, %v133
    %v137 = vmul.f32 %v136, %v135
    %v138 = vmul.f32 0.5, %v137
    %v139 = vsub.f32 1.5, %v138
    %v140 = vmul.f32 %v135, %v139
    %vm141 = vweird.f32 %v133
    %vm142 = vweird.f32 %v135
    %vm143 = vmor %vm141, %vm142
    %v144 = vsel %vm143, %v135, %v140
    %v145 = vrsqrt.pop %v134
    %v146 = vmul.f32 %v145, %v134
    %v147 = vmul.f32 %v146, %v145
    %v148 = vmul.f32 0.5, %v147
    %v149 = vsub.f32 1.5, %v148
    %v150 = vmul.f32 %v145, %v149
    %vm151 = vweird.f32 %v134
    %vm152 = vweird.f32 %v145
    %vm153 = vmor %vm151, %vm152
    %v154 = vsel %vm153, %v145, %v150
    %v155 = vmul.f32 %v104, %v144
    %v156 = vmul.f32 %v106, %v154
    %v157 = vperm.slane %v115, 0
    %v158 = vmul.f32 %v155, %v157
    %v159 = vmul.f32 %v156, %v157
    %v160 = vld [vmem:[%s3] sm:$0xff]
    %v161 = vld [vmem:[%s3 + $0x8] sm:$0xff]
    %v162 = vld [vmem:[%s3 + $0x10] sm:$0xff]
    %v163 = vld [vmem:[%s3 + $0x18] sm:$0xff]
    %v164 = vpack.c.bf16 %v159, %v158
    %v169 = vunpack.c.l.b16 %v160
    %v170 = vunpack.c.h.b16 %v160
    %v171 = vunpack.c.l.b16 %v161
    %v172 = vunpack.c.h.b16 %v161
    %v173 = vunpack.c.l.b16 %v162
    %v174 = vunpack.c.h.b16 %v162
    %v175 = vunpack.c.l.b16 %v163
    %v176 = vunpack.c.h.b16 %v163
    %v177 = vpack.c.b16 %v171, %v169
    %v178 = vpack.c.b16 %v172, %v170
    %v179 = vpack.c.b16 %v175, %v173
    %v180 = vpack.c.b16 %v176, %v174
    %v186 = vsel %vm90, %v164, 0
    %188 = vmatpush.bf16.msra.mxu0 0
    %189 = vmatpush.bf16.msra.mxu0 0
    %190 = vmatpush.bf16.msra.mxu0 0
    %191 = vmatpush.bf16.msra.mxu0 0
    %192 = vmatpush.bf16.msra.mxu0 0
    %193 = vmatpush.bf16.msra.mxu0 0
    %194 = vmatpush.bf16.msra.mxu0 %v179
    %195 = vmatpush.bf16.msra.mxu0 %v177
    %196 = vmatmul.bf16.gmra.mxu0 %v186
    %v197 = vpop.f32.mrf.mxu0
    %v198 = vadd.f32 0.0, %v197
    %v199 = vpop.f32.mrf.mxu0
    %v200 = vadd.f32 0.0, %v199
    %201 = vdwg.mxu0
    %202 = vmatpush.bf16.msra.mxu0 0
    %203 = vmatpush.bf16.msra.mxu0 0
    %204 = vmatpush.bf16.msra.mxu0 0
    %205 = vmatpush.bf16.msra.mxu0 0
    %206 = vmatpush.bf16.msra.mxu0 0
    %207 = vmatpush.bf16.msra.mxu0 0
    %208 = vmatpush.bf16.msra.mxu0 %v180
    %209 = vmatpush.bf16.msra.mxu0 %v178
    %210 = vmatmul.bf16.gmra.mxu0 %v186
    %v211 = vpop.f32.mrf.mxu0
    %v212 = vadd.f32 0.0, %v211
    %v213 = vpop.f32.mrf.mxu0
    %v214 = vadd.f32 0.0, %v213
    %215 = vdwg.mxu0
    %v216 = vld [vmem:[#allocation2 + $0x16] sm:$0x1]
    %v217 = vperm.slane %v216, 0
    %v218 = vmul.f32 %v198, %v217
    %v219 = vmul.f32 %v200, %v217
    %vm220 = vcmp.ge.s32.totalorder %v109, 3
    %vm221 = vcmp.ge.s32.totalorder %v110, 3
    %v222 = vrot.slane %v198, 5
    %v223 = vrot.slane %v200, 5
    %vm224 = vcmp.lt.s32.totalorder %v109, 3
    %v225 = vsel %vm224, %v222, %v223
    %v226 = vsel %vm224, %v223, %v222
    %v227 = vsel %vm220, 1, 0
    %v228 = vsel %vm221, 1, 0
    %vm229 = vcmp.eq.s32.totalorder %v227, 1
    %vm230 = vcmp.eq.s32.totalorder %v228, 1
    %v231 = vsel %vm229, %v226, 0.0
    %v232 = vsel %vm230, %v225, 0.0
    %v233 = vld [vmem:[#allocation2 + $0x13] sm:$0x1]
    %v234 = vperm.slane %v233, 0
    %v235 = vmul.f32 %v231, %v234
    %v236 = vmul.f32 %v232, %v234
    %v237 = vadd.f32 %v218, %v235
    %v238 = vadd.f32 %v219, %v236
    %vm239 = vcmp.ge.s32.totalorder %v109, 2
    %vm240 = vcmp.ge.s32.totalorder %v110, 2
    %v241 = vrot.slane %v198, 6
    %v242 = vrot.slane %v200, 6
    %vm243 = vcmp.lt.s32.totalorder %v109, 2
    %v244 = vsel %vm243, %v241, %v242
    %v245 = vsel %vm243, %v242, %v241
    %v246 = vsel %vm239, 1, 0
    %v247 = vsel %vm240, 1, 0
    %vm248 = vcmp.eq.s32.totalorder %v246, 1
    %vm249 = vcmp.eq.s32.totalorder %v247, 1
    %v250 = vsel %vm248, %v245, 0.0
    %v251 = vsel %vm249, %v244, 0.0
    %v252 = vld [vmem:[#allocation2 + $0x14] sm:$0x1]
    %v253 = vperm.slane %v252, 0
    %v254 = vmul.f32 %v250, %v253
    %v255 = vmul.f32 %v251, %v253
    %v256 = vadd.f32 %v237, %v254
    %v257 = vadd.f32 %v238, %v255
    %vm258 = vcmp.ge.s32.totalorder %v109, 1
    %vm259 = vcmp.ge.s32.totalorder %v110, 1
    %v260 = vrot.slane %v198, 7
    %v261 = vrot.slane %v200, 7
    %vm262 = vcmp.lt.s32.totalorder %v109, 1
    %v263 = vsel %vm262, %v260, %v261
    %v264 = vsel %vm262, %v261, %v260
    %v265 = vsel %vm258, 1, 0
    %v266 = vsel %vm259, 1, 0
    %vm267 = vcmp.eq.s32.totalorder %v265, 1
    %vm268 = vcmp.eq.s32.totalorder %v266, 1
    %v269 = vsel %vm267, %v264, 0.0
    %v270 = vsel %vm268, %v263, 0.0
    %v271 = vld [vmem:[#allocation2 + $0x15] sm:$0x1]
    %v272 = vperm.slane %v271, 0
    %v273 = vmul.f32 %v269, %v272
    %v274 = vmul.f32 %v270, %v272
    %v275 = vadd.f32 %v256, %v273
    %v276 = vadd.f32 %v257, %v274
    %v277 = vld [vmem:[#allocation2 + $0x4] sm:$0x1]
    %v278 = vperm.slane %v277, 0
    %v279 = vadd.f32 %v275, %v278
    %v280 = vadd.f32 %v276, %v278
    %v281 = vxor.u32 %v279, 2147483648
    %v282 = vxor.u32 %v280, 2147483648
    %v283 = vmul.f32 %v281, 1.442695
    %v284 = vpow.pop %v283
    %v285 = vmul.f32 %v282, 1.442695
    %v286 = vpow.pop %v285
    %v287 = vadd.f32 %v284, 1.0
    %v288 = vadd.f32 %v286, 1.0
    %v289 = vrcp.pop %v287
    %v290 = vmul.f32 %v287, %v289
    %v291 = vsub.f32 1.0, %v290
    %v292 = vmul.f32 %v289, %v291
    %v293 = vadd.f32 %v289, %v292
    %vm294 = vweird.f32 %v287
    %vm295 = vweird.f32 %v289
    %vm296 = vmor %vm294, %vm295
    %v297 = vsel %vm296, %v289, %v293
    %v298 = vand.u32 2147483647, %v287
    %vm299 = vcmp.eq.f32.partialorder %v298, 8.507059e+37
    %v300 = vand.u32 %v287, 2147483648
    %v301 = vor.u32 1.1754944e-38, %v300
    %v302 = vsel %vm299, %v301, %v297
    %v303 = vmul.f32 1.0, %v302
    %v304 = vrcp.pop %v288
    %v305 = vmul.f32 %v288, %v304
    %v306 = vsub.f32 1.0, %v305
    %v307 = vmul.f32 %v304, %v306
    %v308 = vadd.f32 %v304, %v307
    %vm309 = vweird.f32 %v288
    %vm310 = vweird.f32 %v304
    %vm311 = vmor %vm309, %vm310
    %v312 = vsel %vm311, %v304, %v308
    %v313 = vand.u32 2147483647, %v288
    %vm314 = vcmp.eq.f32.partialorder %v313, 8.507059e+37
    %v315 = vand.u32 %v288, 2147483648
    %v316 = vor.u32 1.1754944e-38, %v315
    %v317 = vsel %vm314, %v316, %v312
    %v318 = vmul.f32 1.0, %v317
    %v319 = vmul.f32 %v279, %v303
    %v320 = vmul.f32 %v280, %v318
    %323 = vrot.lane.b32.xlu0 %v319, 48
    %v324 = vpop.permute.xlu0 %323
    %325 = vrot.lane.b32.xlu0 %v320, 48
    %v326 = vpop.permute.xlu0 %325
    %327 = vrot.lane.b32.xlu0 %v319, 64
    %v328 = vpop.permute.xlu0 %327
    %329 = vrot.lane.b32.xlu0 %v320, 64
    %v330 = vpop.permute.xlu0 %329
    %v331 = vsel %vm51, %v324, 0
    %v333 = vsel %vm51, %v326, 0
    %v335 = vsel %vm51, %v328, 0
    %v337 = vsel %vm51, %v330, 0
    %339 = vmatpush.xpose.msra.mxu0 0.0
    %340 = vmatpush.xpose.msra.mxu0 0.0
    %341 = vmatpush.xpose.msra.mxu0 0.0
    %342 = vmatpush.xpose.msra.mxu0 0.0
    %343 = vmatpush.xpose.msra.mxu0 0.0
    %344 = vmatpush.xpose.msra.mxu0 0.0
    %345 = vmatpush.xpose.msra.mxu0 0.0
    %346 = vmatpush.xpose.msra.mxu0 0.0
    %347 = vmatpush.xpose.msra.mxu0 0.0
    %348 = vmatpush.xpose.msra.mxu0 0.0
    %349 = vmatpush.xpose.msra.mxu0 0.0
    %350 = vmatpush.xpose.msra.mxu0 0.0
    %351 = vmatpush.xpose.msra.mxu0 0.0
    %352 = vmatpush.xpose.msra.mxu0 0.0
    %353 = vmatpush.xpose.msra.mxu0 %v337
    %354 = vmatpush.xpose.msra.mxu0 %v335
    %355 = vmatmul.f32.gmra.mxu0 %v331
    %v356 = vpop.f32.mrf.mxu0
    %v357 = vadd.f32 0.0, %v356
    %358 = vmatmul.f32.gmra.mxu0 %v333
    %v359 = vpop.f32.mrf.mxu0
    %v360 = vadd.f32 0.0, %v359
    %361 = vdwg.mxu0
    %v362 = vsel %vm113, %v357, 0.0
    %v363 = vsel %vm114, %v360, 0.0
    %v364 = vld [vmem:[#allocation2 + $0x7] sm:$0x1]
    %v365 = vperm.slane %v364, 0
    %367 = vrot.lane.b32.xlu0 %v365, 96
    %v368 = vpop.permute.xlu0 %367
    %v370 = vadd.f32 %v198, %v368
    %v371 = vadd.f32 %v200, %v368
    %vm372 = vcmp.gt.f32.partialorder %v370, 20.0
    %vm373 = vcmp.gt.f32.partialorder %v371, 20.0
    %v374 = vmin.f32 %v370, 20.0
    %v375 = vmin.f32 %v371, 20.0
    %v376 = vmul.f32 %v374, 1.442695
    %v377 = vpow.pop %v376
    %v378 = vmul.f32 %v375, 1.442695
    %v379 = vpow.pop %v378
    %v380 = vadd.f32 %v377, 1.0
    %v381 = vadd.f32 %v379, 1.0
    %v382 = vlog2.pop %v380
    %v383 = vmul.f32 %v382, 0.6931472
    %v384 = vlog2.pop %v381
    %v385 = vmul.f32 %v384, 0.6931472
    %v386 = vsel %vm372, %v370, %v383
    %v387 = vsel %vm373, %v371, %v385
    %v388 = vld [vmem:[#allocation2 + $0x8] sm:$0x1]
    %v389 = vperm.slane %v388, 0
    %391 = vrot.lane.b32.xlu0 %v389, 96
    %v392 = vpop.permute.xlu0 %391
    %v394 = vmul.f32 %v386, %v392
    %v395 = vmul.f32 %v387, %v392
    %398 = vrot.lane.b32.xlu0 %v394, 32
    %v399 = vpop.permute.xlu0 %398
    %400 = vrot.lane.b32.xlu0 %v395, 32
    %v401 = vpop.permute.xlu0 %400
    %v404 = vrot.slane %v399, 7
    %v405 = vrot.slane %v401, 7
    %v406 = vsel %vm262, %v404, %v405
    %v407 = vsel %vm262, %v405, %v404
    %v408 = vsel %vm267, %v407, 0.0
    %v409 = vsel %vm268, %v406, 0.0
    %412 = vrot.lane.b32.xlu0 %v408, 96
    %v413 = vpop.permute.xlu0 %412
    %414 = vrot.lane.b32.xlu0 %v409, 96
    %v415 = vpop.permute.xlu0 %414
    %v418 = vadd.f32 %v394, %v413
    %v419 = vadd.f32 %v395, %v415
    %422 = vrot.lane.b32.xlu0 %v418, 32
    %v423 = vpop.permute.xlu0 %422
    %424 = vrot.lane.b32.xlu0 %v419, 32
    %v425 = vpop.permute.xlu0 %424
    %v428 = vrot.slane %v423, 6
    %v429 = vrot.slane %v425, 6
    %v430 = vsel %vm243, %v428, %v429
    %v431 = vsel %vm243, %v429, %v428
    %v432 = vsel %vm248, %v431, 0.0
    %v433 = vsel %vm249, %v430, 0.0
    %436 = vrot.lane.b32.xlu0 %v432, 96
    %v437 = vpop.permute.xlu0 %436
    %438 = vrot.lane.b32.xlu0 %v433, 96
    %v439 = vpop.permute.xlu0 %438
    %v442 = vadd.f32 %v418, %v437
    %v443 = vadd.f32 %v419, %v439
    %vm444 = vcmp.ge.s32.totalorder %v109, 4
    %vm445 = vcmp.ge.s32.totalorder %v110, 4
    %448 = vrot.lane.b32.xlu0 %v442, 32
    %v449 = vpop.permute.xlu0 %448
    %450 = vrot.lane.b32.xlu0 %v443, 32
    %v451 = vpop.permute.xlu0 %450
    %v454 = vrot.slane %v449, 4
    %v455 = vrot.slane %v451, 4
    %vm456 = vcmp.lt.s32.totalorder %v109, 4
    %v457 = vsel %vm456, %v454, %v455
    %v458 = vsel %vm456, %v455, %v454
    %v459 = vsel %vm444, 1, 0
    %v460 = vsel %vm445, 1, 0
    %vm461 = vcmp.eq.s32.totalorder %v459, 1
    %vm462 = vcmp.eq.s32.totalorder %v460, 1
    %v463 = vsel %vm461, %v458, 0.0
    %v464 = vsel %vm462, %v457, 0.0
    %467 = vrot.lane.b32.xlu0 %v463, 96
    %v468 = vpop.permute.xlu0 %467
    %469 = vrot.lane.b32.xlu0 %v464, 96
    %v470 = vpop.permute.xlu0 %469
    %v473 = vadd.f32 %v442, %v468
    %v474 = vadd.f32 %v443, %v470
    %vm475 = vcmp.ge.s32.totalorder %v109, 8
    %vm476 = vcmp.ge.s32.totalorder %v110, 8
    %479 = vrot.lane.b32.xlu0 %v473, 32
    %v480 = vpop.permute.xlu0 %479
    %481 = vrot.lane.b32.xlu0 %v474, 32
    %v482 = vpop.permute.xlu0 %481
    %v485 = vsel %vm475, 1, 0
    %v486 = vsel %vm476, 1, 0
    %vm487 = vcmp.eq.s32.totalorder %v485, 1
    %vm488 = vcmp.eq.s32.totalorder %v486, 1
    %v489 = vsel %vm487, %v482, 0.0
    %v490 = vsel %vm488, %v480, 0.0
    %493 = vrot.lane.b32.xlu0 %v489, 96
    %v494 = vpop.permute.xlu0 %493
    %495 = vrot.lane.b32.xlu0 %v490, 96
    %v496 = vpop.permute.xlu0 %495
    %v499 = vadd.f32 %v473, %v494
    %v500 = vadd.f32 %v474, %v496
    %503 = vrot.lane.b32.xlu0 %v499, 32
    %v504 = vpop.permute.xlu0 %503
    %505 = vrot.lane.b32.xlu0 %v500, 32
    %v506 = vpop.permute.xlu0 %505
    %vm507 = vcmask 7168
    %v509 = vsel %vm507, 1.0, 0
    %v511 = vsel %vm507, %v504, 0
    %v513 = vsel %vm507, %v506, 0
    %515 = vmatpush.xpose.msra.mxu0 0.0
    %516 = vmatpush.xpose.msra.mxu0 0.0
    %517 = vmatpush.xpose.msra.mxu0 0.0
    %518 = vmatpush.xpose.msra.mxu0 0.0
    %519 = vmatpush.xpose.msra.mxu0 0.0
    %520 = vmatpush.xpose.msra.mxu0 0.0
    %521 = vmatpush.xpose.msra.mxu0 0.0
    %522 = vmatpush.xpose.msra.mxu0 0.0
    %523 = vmatpush.xpose.msra.mxu0 0.0
    %524 = vmatpush.xpose.msra.mxu0 0.0
    %525 = vmatpush.xpose.msra.mxu0 0.0
    %526 = vmatpush.xpose.msra.mxu0 0.0
    %527 = vmatpush.xpose.msra.mxu0 0.0
    %528 = vmatpush.xpose.msra.mxu0 0.0
    %529 = vmatpush.xpose.msra.mxu0 %v513
    %530 = vmatpush.xpose.msra.mxu0 %v511
    %531 = vmatmul.f32.gmra.mxu0 %v509
    %v532 = vpop.f32.mrf.mxu0
    %v533 = vadd.f32 0.0, %v532
    %534 = vmatmul.f32.gmra.mxu0 %v509
    %v535 = vpop.f32.mrf.mxu0
    %v536 = vadd.f32 0.0, %v535
    %537 = vdwg.mxu0
    %538 = vset.pattern.permute.xlu0 96
    %539 = vperm.xlu0 %538, %v499
    %v540 = vpop.permute.xlu0 %539
    %542 = vset.pattern.permute.xlu0 96
    %543 = vperm.xlu0 %542, %v500
    %v544 = vpop.permute.xlu0 %543
    %v546 = vsub.f32 %v540, %v533
    %v547 = vsub.f32 %v544, %v536
    %v548 = vsel %vm113, %v546, -1e+30
    %v549 = vsel %vm114, %v547, -1e+30
    %v550 = vmul.f32 %v548, 1.442695
    %v551 = vpow.pop %v550
    %v552 = vmul.f32 %v549, 1.442695
    %v553 = vpow.pop %v552
    %v554 = vmul.f32 %v551, %v362
    %v555 = vmul.f32 %v553, %v363
    %vm556 = vcmp.ge.s32.totalorder %v112, 0
    %vm557 = vcmp.lt.s32.totalorder %v112, 32
    %vm558 = vmand %vm556, %vm557
    %560 = vset.pattern.permute.xlu0 96
    %561 = vperm.xlu0 %560, %v386
    %v562 = vpop.permute.xlu0 %561
    %565 = vset.pattern.permute.xlu0 96
    %566 = vperm.xlu0 %565, %v387
    %v567 = vpop.permute.xlu0 %566
    %v569 = vmul.f32 %v319, %v562
    %v570 = vmul.f32 %v320, %v567
    %v571 = vsel %vm558, 1, 0
    %vm572 = vcmp.eq.s32.totalorder %v571, 1
    %v573 = vsel %vm572, %v569, 0.0
    %v574 = vsel %vm572, %v570, 0.0
    %575 = vrot.lane.b32.xlu0 %v499, 31
    %v576 = vpop.permute.xlu0 %575
    %577 = vrot.lane.b32.xlu0 %v500, 31
    %v578 = vpop.permute.xlu0 %577
    %v579 = vsel %vm507, %v576, 0
    %v581 = vsel %vm507, %v578, 0
    %583 = vmatpush.xpose.msra.mxu0 0.0
    %584 = vmatpush.xpose.msra.mxu0 0.0
    %585 = vmatpush.xpose.msra.mxu0 0.0
    %586 = vmatpush.xpose.msra.mxu0 0.0
    %587 = vmatpush.xpose.msra.mxu0 0.0
    %588 = vmatpush.xpose.msra.mxu0 0.0
    %589 = vmatpush.xpose.msra.mxu0 0.0
    %590 = vmatpush.xpose.msra.mxu0 0.0
    %591 = vmatpush.xpose.msra.mxu0 0.0
    %592 = vmatpush.xpose.msra.mxu0 0.0
    %593 = vmatpush.xpose.msra.mxu0 0.0
    %594 = vmatpush.xpose.msra.mxu0 0.0
    %595 = vmatpush.xpose.msra.mxu0 0.0
    %596 = vmatpush.xpose.msra.mxu0 0.0
    %597 = vmatpush.xpose.msra.mxu0 %v581
    %598 = vmatpush.xpose.msra.mxu0 %v579
    %599 = vmatmul.f32.gmra.mxu0 %v509
    %v600 = vpop.f32.mrf.mxu0
    %v601 = vadd.f32 0.0, %v600
    %602 = vmatmul.f32.gmra.mxu0 %v509
    %v603 = vpop.f32.mrf.mxu0
    %v604 = vadd.f32 0.0, %v603
    %605 = vdwg.mxu0
    %606 = vset.pattern.permute.xlu0 97
    %607 = vperm.xlu0 %606, %v499
    %v608 = vpop.permute.xlu0 %607
    %610 = vset.pattern.permute.xlu0 97
    %611 = vperm.xlu0 %610, %v500
    %v612 = vpop.permute.xlu0 %611
    %v614 = vsub.f32 %v608, %v601
    %v615 = vsub.f32 %v612, %v604
    %v616 = vsel %vm113, %v614, -1e+30
    %v617 = vsel %vm114, %v615, -1e+30
    %v618 = vmul.f32 %v616, 1.442695
    %v619 = vpow.pop %v618
    %v620 = vmul.f32 %v617, 1.442695
    %v621 = vpow.pop %v620
    %v622 = vmul.f32 %v619, %v362
    %v623 = vmul.f32 %v621, %v363
    %vm624 = vcmp.ge.s32.totalorder %v112, 32
    %vm625 = vcmp.lt.s32.totalorder %v112, 64
    %vm626 = vmand %vm624, %vm625
    %627 = vset.pattern.permute.xlu0 97
    %628 = vperm.xlu0 %627, %v386
    %v629 = vpop.permute.xlu0 %628
    %631 = vset.pattern.permute.xlu0 97
    %632 = vperm.xlu0 %631, %v387
    %v633 = vpop.permute.xlu0 %632
    %v635 = vmul.f32 %v319, %v629
    %v636 = vmul.f32 %v320, %v633
    %v637 = vsel %vm626, 1, 0
    %vm638 = vcmp.eq.s32.totalorder %v637, 1
    %v639 = vsel %vm638, %v635, 0.0
    %v640 = vsel %vm638, %v636, 0.0
    %643 = vrot.lane.b32.xlu0 %v622, 16
    %v644 = vpop.permute.xlu0 %643
    %645 = vrot.lane.b32.xlu0 %v623, 16
    %v646 = vpop.permute.xlu0 %645
    %v649 = vsel %vm51, %v554, %v644
    %v650 = vsel %vm51, %v555, %v646
    %v651 = vld [vmem:[#allocation2 + $0x9] sm:$0x1]
    %v652 = vperm.slane %v651, 0
    %v653 = vmul.f32 %v319, %v652
    %v654 = vmul.f32 %v320, %v652
    %v656 = vsel %vm90, %v649, 0
    %v659 = vsel %vm90, %v650, 0
    %661 = vmatpush.msra.mxu0 0.0
    %662 = vmatpush.msra.mxu0 0.0
    %663 = vmatpush.msra.mxu0 0.0
    %664 = vmatpush.msra.mxu0 0.0
    %665 = vmatpush.msra.mxu0 0.0
    %666 = vmatpush.msra.mxu0 0.0
    %667 = vmatpush.msra.mxu0 0.0
    %668 = vmatpush.msra.mxu0 0.0
    %669 = vmatpush.msra.mxu0 0.0
    %670 = vmatpush.msra.mxu0 0.0
    %671 = vmatpush.msra.mxu0 0.0
    %672 = vmatpush.msra.mxu0 0.0
    %673 = vmatpush.msra.mxu0 %v640
    %674 = vmatpush.msra.mxu0 %v639
    %675 = vmatpush.msra.mxu0 %v574
    %676 = vmatpush.msra.mxu0 %v573
    %677 = vmatmul.f32.gmra.mxu0 %v656
    %v678 = vpop.f32.mrf.mxu0
    %v679 = vadd.f32 0.0, %v678
    %680 = vmatmul.f32.gmra.mxu0 %v659
    %v681 = vpop.f32.mrf.mxu0
    %v682 = vadd.f32 0.0, %v681
    %683 = vdwg.mxu0
    %v684 = vadd.f32 %v653, %v679
    %v685 = vadd.f32 %v654, %v682
    %v686 = vxor.u32 %v212, 2147483648
    %v687 = vxor.u32 %v214, 2147483648
    %v688 = vmul.f32 %v686, 1.442695
    %v689 = vpow.pop %v688
    %v690 = vmul.f32 %v687, 1.442695
    %v691 = vpow.pop %v690
    %v692 = vadd.f32 %v689, 1.0
    %v693 = vadd.f32 %v691, 1.0
    %v694 = vrcp.pop %v692
    %v695 = vmul.f32 %v692, %v694
    %v696 = vsub.f32 1.0, %v695
    %v697 = vmul.f32 %v694, %v696
    %v698 = vadd.f32 %v694, %v697
    %vm699 = vweird.f32 %v692
    %vm700 = vweird.f32 %v694
    %vm701 = vmor %vm699, %vm700
    %v702 = vsel %vm701, %v694, %v698
    %v703 = vand.u32 2147483647, %v692
    %vm704 = vcmp.eq.f32.partialorder %v703, 8.507059e+37
    %v705 = vand.u32 %v692, 2147483648
    %v706 = vor.u32 1.1754944e-38, %v705
    %v707 = vsel %vm704, %v706, %v702
    %v708 = vmul.f32 1.0, %v707
    %v709 = vrcp.pop %v693
    %v710 = vmul.f32 %v693, %v709
    %v711 = vsub.f32 1.0, %v710
    %v712 = vmul.f32 %v709, %v711
    %v713 = vadd.f32 %v709, %v712
    %vm714 = vweird.f32 %v693
    %vm715 = vweird.f32 %v709
    %vm716 = vmor %vm714, %vm715
    %v717 = vsel %vm716, %v709, %v713
    %v718 = vand.u32 2147483647, %v693
    %vm719 = vcmp.eq.f32.partialorder %v718, 8.507059e+37
    %v720 = vand.u32 %v693, 2147483648
    %v721 = vor.u32 1.1754944e-38, %v720
    %v722 = vsel %vm719, %v721, %v717
    %v723 = vmul.f32 1.0, %v722
    %v724 = vmul.f32 %v212, %v708
    %v725 = vmul.f32 %v214, %v723
    %v726 = vmul.f32 %v684, %v724
    %v727 = vmul.f32 %v685, %v725
    %v728 = vld [vmem:[#allocation2 + $0x5] sm:$0x1]
    %v729 = vmul.f32 %v726, %v726
    %v730 = vmul.f32 %v727, %v727
    %vm731 = vcmask 523264
    %v732 = vsel %vm731, %v729, 0.0
    %733 = vadd.xlane.f32.xlu0 %v732
    %v734 = vpop.xlane.xlu0 %733
    %v735 = vsel %vm731, %v730, 0.0
    %736 = vadd.xlane.f32.xlu0 %v735
    %v737 = vpop.xlane.xlu0 %736
    %v738 = vrcp.pop 64.0
    %v739 = vmul.f32 64.0, %v738
    %v740 = vsub.f32 1.0, %v739
    %v741 = vmul.f32 %v738, %v740
    %v742 = vadd.f32 %v738, %v741
    %vm743 = vweird.f32 %v738
    %v744 = vsel %vm743, %v738, %v742
    %v745 = vmul.f32 %v734, %v744
    %v746 = vmul.f32 %v737, %v744
    %v747 = vadd.f32 %v745, 1e-05
    %v748 = vadd.f32 %v746, 1e-05
    %v749 = vrsqrt.pop %v747
    %v750 = vmul.f32 %v749, %v747
    %v751 = vmul.f32 %v750, %v749
    %v752 = vmul.f32 0.5, %v751
    %v753 = vsub.f32 1.5, %v752
    %v754 = vmul.f32 %v749, %v753
    %vm755 = vweird.f32 %v747
    %vm756 = vweird.f32 %v749
    %vm757 = vmor %vm755, %vm756
    %v758 = vsel %vm757, %v749, %v754
    %v759 = vrsqrt.pop %v748
    %v760 = vmul.f32 %v759, %v748
    %v761 = vmul.f32 %v760, %v759
    %v762 = vmul.f32 0.5, %v761
    %v763 = vsub.f32 1.5, %v762
    %v764 = vmul.f32 %v759, %v763
    %vm765 = vweird.f32 %v748
    %vm766 = vweird.f32 %v759
    %vm767 = vmor %vm765, %vm766
    %v768 = vsel %vm767, %v759, %v764
    %v769 = vmul.f32 %v726, %v758
    %v770 = vmul.f32 %v727, %v768
    %v771 = vperm.slane %v728, 0
    %v772 = vmul.f32 %v769, %v771
    %v773 = vmul.f32 %v770, %v771
    %v774 = vld [vmem:[%s2 + $0x28] sm:$0xf]
    %v775 = vld [vmem:[%s2 + $0x2c] sm:$0xf]
    %v776 = vld [vmem:[%s2 + $0x30] sm:$0xf]
    %v777 = vld [vmem:[%s2 + $0x34] sm:$0xf]
    %v778 = vld [vmem:[%s2 + $0x38] sm:$0xf]
    %v779 = vld [vmem:[%s2 + $0x3c] sm:$0xf]
    %v780 = vld [vmem:[%s2 + $0x40] sm:$0xf]
    %v781 = vld [vmem:[%s2 + $0x44] sm:$0xf]
    %v782 = vpack.c.bf16 %v773, %v772
    %v791 = vunpack.c.l.b16 %v774
    %v792 = vunpack.c.l.b16 %v775
    %v793 = vunpack.c.l.b16 %v776
    %v794 = vunpack.c.l.b16 %v777
    %v795 = vunpack.c.l.b16 %v778
    %v796 = vunpack.c.l.b16 %v779
    %v797 = vunpack.c.l.b16 %v780
    %v798 = vunpack.c.l.b16 %v781
    %v799 = vpack.c.b16 %v792, %v791
    %v800 = vpack.c.b16 %v794, %v793
    %v801 = vpack.c.b16 %v796, %v795
    %v802 = vpack.c.b16 %v798, %v797
    %v808 = vsel %vm731, %v782, 0
    %810 = vmatpush.bf16.msra.mxu0 0
    %811 = vmatpush.bf16.msra.mxu0 0
    %812 = vmatpush.bf16.msra.mxu0 0
    %813 = vmatpush.bf16.msra.mxu0 0
    %814 = vmatpush.bf16.msra.mxu0 %v802
    %815 = vmatpush.bf16.msra.mxu0 %v801
    %816 = vmatpush.bf16.msra.mxu0 %v800
    %817 = vmatpush.bf16.msra.mxu0 %v799
    %818 = vmatmul.bf16.gmra.mxu0 %v808
    %v819 = vpop.f32.mrf.mxu0
    %v820 = vadd.f32 0.0, %v819
    %v821 = vpop.f32.mrf.mxu0
    %v822 = vadd.f32 0.0, %v821
    %823 = vdwg.mxu0
    %v824 = vadd.f32 %v104, %v820
    %v825 = vadd.f32 %v106, %v822
    %v826 = vld [vmem:[#allocation2 + $0x3] sm:$0x1]
    %v827 = vmul.f32 %v824, %v824
    %v828 = vmul.f32 %v825, %v825
    %v829 = vsel %vm90, %v827, 0.0
    %830 = vadd.xlane.f32.xlu0 %v829
    %v831 = vpop.xlane.xlu0 %830
    %v832 = vsel %vm90, %v828, 0.0
    %833 = vadd.xlane.f32.xlu0 %v832
    %v834 = vpop.xlane.xlu0 %833
    %v835 = vmul.f32 %v831, %v130
    %v836 = vmul.f32 %v834, %v130
    %v837 = vadd.f32 %v835, 1e-05
    %v838 = vadd.f32 %v836, 1e-05
    %v839 = vrsqrt.pop %v837
    %v840 = vmul.f32 %v839, %v837
    %v841 = vmul.f32 %v840, %v839
    %v842 = vmul.f32 0.5, %v841
    %v843 = vsub.f32 1.5, %v842
    %v844 = vmul.f32 %v839, %v843
    %vm845 = vweird.f32 %v837
    %vm846 = vweird.f32 %v839
    %vm847 = vmor %vm845, %vm846
    %v848 = vsel %vm847, %v839, %v844
    %v849 = vrsqrt.pop %v838
    %v850 = vmul.f32 %v849, %v838
    %v851 = vmul.f32 %v850, %v849
    %v852 = vmul.f32 0.5, %v851
    %v853 = vsub.f32 1.5, %v852
    %v854 = vmul.f32 %v849, %v853
    %vm855 = vweird.f32 %v838
    %vm856 = vweird.f32 %v849
    %vm857 = vmor %vm855, %vm856
    %v858 = vsel %vm857, %v849, %v854
    %v859 = vmul.f32 %v824, %v848
    %v860 = vmul.f32 %v825, %v858
    %v861 = vperm.slane %v826, 0
    %v862 = vmul.f32 %v859, %v861
    %v863 = vmul.f32 %v860, %v861
    %v864 = vld [vmem:[%s2 + $0x18] sm:$0xf]
    %v865 = vld [vmem:[%s2 + $0x1c] sm:$0xf]
    %v866 = vld [vmem:[%s2 + $0x20] sm:$0xf]
    %v867 = vld [vmem:[%s2 + $0x24] sm:$0xf]
    %v868 = vpack.c.bf16 %v863, %v862
    %v873 = vunpack.c.l.b16 %v864
    %v874 = vunpack.c.l.b16 %v865
    %v875 = vunpack.c.l.b16 %v866
    %v876 = vunpack.c.l.b16 %v867
    %v877 = vpack.c.b16 %v874, %v873
    %v878 = vpack.c.b16 %v876, %v875
    %v882 = vsel %vm90, %v868, 0
    %884 = vmatpush.bf16.msra.mxu0 0
    %885 = vmatpush.bf16.msra.mxu0 0
    %886 = vmatpush.bf16.msra.mxu0 0
    %887 = vmatpush.bf16.msra.mxu0 0
    %888 = vmatpush.bf16.msra.mxu0 0
    %889 = vmatpush.bf16.msra.mxu0 0
    %890 = vmatpush.bf16.msra.mxu0 %v878
    %891 = vmatpush.bf16.msra.mxu0 %v877
    %892 = vmatmul.bf16.gmra.mxu0 %v882
    %v893 = vpop.f32.mrf.mxu0
    %v894 = vadd.f32 0.0, %v893
    %v895 = vpop.f32.mrf.mxu0
    %v896 = vadd.f32 0.0, %v895
    %897 = vdwg.mxu0
    %v898 = vld [vmem:[%s3 + $0x20] sm:$0xf]
    %v899 = vld [vmem:[%s3 + $0x28] sm:$0xf]
    %v900 = vld [vmem:[%s3 + $0x30] sm:$0xf]
    %v901 = vld [vmem:[%s3 + $0x38] sm:$0xf]
    %v902 = vpack.c.bf16 %v896, %v894
    %v903 = vld [vmem:[#allocation2 + $0xa] sm:$0x1]
    %v904 = vperm.slane %v903, 0
    %v909 = vunpack.c.l.b16 %v898
    %v910 = vunpack.c.l.b16 %v899
    %v911 = vunpack.c.l.b16 %v900
    %v912 = vunpack.c.l.b16 %v901
    %v913 = vpack.c.b16 %v910, %v909
    %v914 = vpack.c.b16 %v912, %v911
    %v918 = vsel %vm90, %v902, 0
    %920 = vmatpush.bf16.msra.mxu0 0
    %921 = vmatpush.bf16.msra.mxu0 0
    %922 = vmatpush.bf16.msra.mxu0 0
    %923 = vmatpush.bf16.msra.mxu0 0
    %924 = vmatpush.bf16.msra.mxu0 0
    %925 = vmatpush.bf16.msra.mxu0 0
    %926 = vmatpush.bf16.msra.mxu0 %v914
    %927 = vmatpush.bf16.msra.mxu0 %v913
    %928 = vmatmul.bf16.gmra.mxu0 %v918
    %v929 = vpop.f32.mrf.mxu0
    %v930 = vadd.f32 %v904, %v929
    %v931 = vpop.f32.mrf.mxu0
    %v932 = vadd.f32 %v904, %v931
    %933 = vdwg.mxu0
    %v934 = vld [vmem:[#allocation2 + $0xb] sm:$0x1]
    %v935 = vld [vmem:[#allocation2 + $0xc] sm:$0x1]
    %936 = vadd.xlane.f32.xlu0 %v930
    %v937 = vpop.xlane.xlu0 %936
    %938 = vadd.xlane.f32.xlu0 %v932
    %v939 = vpop.xlane.xlu0 %938
    %v940 = vrcp.pop 128.0
    %v941 = vmul.f32 128.0, %v940
    %v942 = vsub.f32 1.0, %v941
    %v943 = vmul.f32 %v940, %v942
    %v944 = vadd.f32 %v940, %v943
    %vm945 = vweird.f32 %v940
    %v946 = vsel %vm945, %v940, %v944
    %v947 = vmul.f32 %v937, %v946
    %v948 = vmul.f32 %v939, %v946
    %v949 = vsub.f32 %v930, %v947
    %v950 = vsub.f32 %v932, %v948
    %v951 = vmul.f32 %v949, %v949
    %v952 = vmul.f32 %v950, %v950
    %953 = vadd.xlane.f32.xlu0 %v951
    %v954 = vpop.xlane.xlu0 %953
    %955 = vadd.xlane.f32.xlu0 %v952
    %v956 = vpop.xlane.xlu0 %955
    %v957 = vmul.f32 %v954, %v946
    %v958 = vmul.f32 %v956, %v946
    %v959 = vadd.f32 %v957, 1e-05
    %v960 = vadd.f32 %v958, 1e-05
    %v961 = vrsqrt.pop %v959
    %v962 = vmul.f32 %v961, %v959
    %v963 = vmul.f32 %v962, %v961
    %v964 = vmul.f32 0.5, %v963
    %v965 = vsub.f32 1.5, %v964
    %v966 = vmul.f32 %v961, %v965
    %vm967 = vweird.f32 %v959
    %vm968 = vweird.f32 %v961
    %vm969 = vmor %vm967, %vm968
    %v970 = vsel %vm969, %v961, %v966
    %v971 = vrsqrt.pop %v960
    %v972 = vmul.f32 %v971, %v960
    %v973 = vmul.f32 %v972, %v971
    %v974 = vmul.f32 0.5, %v973
    %v975 = vsub.f32 1.5, %v974
    %v976 = vmul.f32 %v971, %v975
    %vm977 = vweird.f32 %v960
    %vm978 = vweird.f32 %v971
    %vm979 = vmor %vm977, %vm978
    %v980 = vsel %vm979, %v971, %v976
    %v981 = vmul.f32 %v949, %v970
    %v982 = vmul.f32 %v950, %v980
    %v983 = vperm.slane %v934, 0
    %v984 = vmul.f32 %v981, %v983
    %v985 = vmul.f32 %v982, %v983
    %v986 = vperm.slane %v935, 0
    %v987 = vadd.f32 %v984, %v986
    %v988 = vadd.f32 %v985, %v986
    %v989 = vmax.f32 %v987, 0.0
    %v990 = vmax.f32 %v988, 0.0
    %v991 = vld [vmem:[%s4] sm:$0xf]
    %v992 = vld [vmem:[%s4 + $0x8] sm:$0xf]
    %v993 = vld [vmem:[%s4 + $0x10] sm:$0xf]
    %v994 = vld [vmem:[%s4 + $0x18] sm:$0xf]
    %v995 = vld [vmem:[%s4 + $0x20] sm:$0xf]
    %v996 = vld [vmem:[%s4 + $0x28] sm:$0xf]
    %v997 = vld [vmem:[%s4 + $0x30] sm:$0xf]
    %v998 = vld [vmem:[%s4 + $0x38] sm:$0xf]
    %v999 = vld [vmem:[%s4 + $0x40] sm:$0xf]
    %v1000 = vld [vmem:[%s4 + $0x48] sm:$0xf]
    %v1001 = vld [vmem:[%s4 + $0x50] sm:$0xf]
    %v1002 = vld [vmem:[%s4 + $0x58] sm:$0xf]
    %v1003 = vld [vmem:[%s4 + $0x60] sm:$0xf]
    %v1004 = vld [vmem:[%s4 + $0x68] sm:$0xf]
    %v1005 = vld [vmem:[%s4 + $0x70] sm:$0xf]
    %v1006 = vld [vmem:[%s4 + $0x78] sm:$0xf]
    %v1007 = vpack.c.bf16 %v990, %v989
    %v1008 = vld [vmem:[#allocation2 + $0xd] sm:$0x1]
    %v1009 = vperm.slane %v1008, 0
    %v1026 = vunpack.c.l.b16 %v991
    %v1027 = vunpack.c.l.b16 %v992
    %v1028 = vunpack.c.l.b16 %v993
    %v1029 = vunpack.c.l.b16 %v994
    %v1030 = vunpack.c.l.b16 %v995
    %v1031 = vunpack.c.l.b16 %v996
    %v1032 = vunpack.c.l.b16 %v997
    %v1033 = vunpack.c.l.b16 %v998
    %v1034 = vunpack.c.l.b16 %v999
    %v1035 = vunpack.c.l.b16 %v1000
    %v1036 = vunpack.c.l.b16 %v1001
    %v1037 = vunpack.c.l.b16 %v1002
    %v1038 = vunpack.c.l.b16 %v1003
    %v1039 = vunpack.c.l.b16 %v1004
    %v1040 = vunpack.c.l.b16 %v1005
    %v1041 = vunpack.c.l.b16 %v1006
    %v1042 = vpack.c.b16 %v1027, %v1026
    %v1043 = vpack.c.b16 %v1029, %v1028
    %v1044 = vpack.c.b16 %v1031, %v1030
    %v1045 = vpack.c.b16 %v1033, %v1032
    %v1046 = vpack.c.b16 %v1035, %v1034
    %v1047 = vpack.c.b16 %v1037, %v1036
    %v1048 = vpack.c.b16 %v1039, %v1038
    %v1049 = vpack.c.b16 %v1041, %v1040
    %1058 = vmatpush.bf16.msra.mxu0 %v1049
    %1059 = vmatpush.bf16.msra.mxu0 %v1048
    %1060 = vmatpush.bf16.msra.mxu0 %v1047
    %1061 = vmatpush.bf16.msra.mxu0 %v1046
    %1062 = vmatpush.bf16.msra.mxu0 %v1045
    %1063 = vmatpush.bf16.msra.mxu0 %v1044
    %1064 = vmatpush.bf16.msra.mxu0 %v1043
    %1065 = vmatpush.bf16.msra.mxu0 %v1042
    %1066 = vmatmul.bf16.gmra.mxu0 %v1007
    %v1067 = vpop.f32.mrf.mxu0
    %v1068 = vadd.f32 %v1009, %v1067
    %v1069 = vpop.f32.mrf.mxu0
    %v1070 = vadd.f32 %v1009, %v1069
    %1071 = vdwg.mxu0
    %v1072 = vld [vmem:[#allocation2 + $0xe] sm:$0x1]
    %v1073 = vld [vmem:[#allocation2 + $0xf] sm:$0x1]
    %1074 = vadd.xlane.f32.xlu0 %v1068
    %v1075 = vpop.xlane.xlu0 %1074
    %1076 = vadd.xlane.f32.xlu0 %v1070
    %v1077 = vpop.xlane.xlu0 %1076
    %v1078 = vmul.f32 %v1075, %v946
    %v1079 = vmul.f32 %v1077, %v946
    %v1080 = vsub.f32 %v1068, %v1078
    %v1081 = vsub.f32 %v1070, %v1079
    %v1082 = vmul.f32 %v1080, %v1080
    %v1083 = vmul.f32 %v1081, %v1081
    %1084 = vadd.xlane.f32.xlu0 %v1082
    %v1085 = vpop.xlane.xlu0 %1084
    %1086 = vadd.xlane.f32.xlu0 %v1083
    %v1087 = vpop.xlane.xlu0 %1086
    %v1088 = vmul.f32 %v1085, %v946
    %v1089 = vmul.f32 %v1087, %v946
    %v1090 = vadd.f32 %v1088, 1e-05
    %v1091 = vadd.f32 %v1089, 1e-05
    %v1092 = vrsqrt.pop %v1090
    %v1093 = vmul.f32 %v1092, %v1090
    %v1094 = vmul.f32 %v1093, %v1092
    %v1095 = vmul.f32 0.5, %v1094
    %v1096 = vsub.f32 1.5, %v1095
    %v1097 = vmul.f32 %v1092, %v1096
    %vm1098 = vweird.f32 %v1090
    %vm1099 = vweird.f32 %v1092
    %vm1100 = vmor %vm1098, %vm1099
    %v1101 = vsel %vm1100, %v1092, %v1097
    %v1102 = vrsqrt.pop %v1091
    %v1103 = vmul.f32 %v1102, %v1091
    %v1104 = vmul.f32 %v1103, %v1102
    %v1105 = vmul.f32 0.5, %v1104
    %v1106 = vsub.f32 1.5, %v1105
    %v1107 = vmul.f32 %v1102, %v1106
    %vm1108 = vweird.f32 %v1091
    %vm1109 = vweird.f32 %v1102
    %vm1110 = vmor %vm1108, %vm1109
    %v1111 = vsel %vm1110, %v1102, %v1107
    %v1112 = vmul.f32 %v1080, %v1101
    %v1113 = vmul.f32 %v1081, %v1111
    %v1114 = vperm.slane %v1072, 0
    %v1115 = vmul.f32 %v1112, %v1114
    %v1116 = vmul.f32 %v1113, %v1114
    %v1117 = vperm.slane %v1073, 0
    %v1118 = vadd.f32 %v1115, %v1117
    %v1119 = vadd.f32 %v1116, %v1117
    %v1120 = vmax.f32 %v1118, 0.0
    %v1121 = vmax.f32 %v1119, 0.0
    %v1122 = vld [vmem:[%s4 + $0x4] sm:$0xf]
    %v1123 = vld [vmem:[%s4 + $0xc] sm:$0xf]
    %v1124 = vld [vmem:[%s4 + $0x14] sm:$0xf]
    %v1125 = vld [vmem:[%s4 + $0x1c] sm:$0xf]
    %v1126 = vld [vmem:[%s4 + $0x24] sm:$0xf]
    %v1127 = vld [vmem:[%s4 + $0x2c] sm:$0xf]
    %v1128 = vld [vmem:[%s4 + $0x34] sm:$0xf]
    %v1129 = vld [vmem:[%s4 + $0x3c] sm:$0xf]
    %v1130 = vld [vmem:[%s4 + $0x44] sm:$0xf]
    %v1131 = vld [vmem:[%s4 + $0x4c] sm:$0xf]
    %v1132 = vld [vmem:[%s4 + $0x54] sm:$0xf]
    %v1133 = vld [vmem:[%s4 + $0x5c] sm:$0xf]
    %v1134 = vld [vmem:[%s4 + $0x64] sm:$0xf]
    %v1135 = vld [vmem:[%s4 + $0x6c] sm:$0xf]
    %v1136 = vld [vmem:[%s4 + $0x74] sm:$0xf]
    %v1137 = vld [vmem:[%s4 + $0x7c] sm:$0xf]
    %v1138 = vpack.c.bf16 %v1121, %v1120
    %v1139 = vld [vmem:[#allocation2 + $0x10] sm:$0x1]
    %v1140 = vperm.slane %v1139, 0
    %v1157 = vunpack.c.l.b16 %v1122
    %v1158 = vunpack.c.l.b16 %v1123
    %v1159 = vunpack.c.l.b16 %v1124
    %v1160 = vunpack.c.l.b16 %v1125
    %v1161 = vunpack.c.l.b16 %v1126
    %v1162 = vunpack.c.l.b16 %v1127
    %v1163 = vunpack.c.l.b16 %v1128
    %v1164 = vunpack.c.l.b16 %v1129
    %v1165 = vunpack.c.l.b16 %v1130
    %v1166 = vunpack.c.l.b16 %v1131
    %v1167 = vunpack.c.l.b16 %v1132
    %v1168 = vunpack.c.l.b16 %v1133
    %v1169 = vunpack.c.l.b16 %v1134
    %v1170 = vunpack.c.l.b16 %v1135
    %v1171 = vunpack.c.l.b16 %v1136
    %v1172 = vunpack.c.l.b16 %v1137
    %v1173 = vpack.c.b16 %v1158, %v1157
    %v1174 = vpack.c.b16 %v1160, %v1159
    %v1175 = vpack.c.b16 %v1162, %v1161
    %v1176 = vpack.c.b16 %v1164, %v1163
    %v1177 = vpack.c.b16 %v1166, %v1165
    %v1178 = vpack.c.b16 %v1168, %v1167
    %v1179 = vpack.c.b16 %v1170, %v1169
    %v1180 = vpack.c.b16 %v1172, %v1171
    %1189 = vmatpush.bf16.msra.mxu0 %v1180
    %1190 = vmatpush.bf16.msra.mxu0 %v1179
    %1191 = vmatpush.bf16.msra.mxu0 %v1178
    %1192 = vmatpush.bf16.msra.mxu0 %v1177
    %1193 = vmatpush.bf16.msra.mxu0 %v1176
    %1194 = vmatpush.bf16.msra.mxu0 %v1175
    %1195 = vmatpush.bf16.msra.mxu0 %v1174
    %1196 = vmatpush.bf16.msra.mxu0 %v1173
    %1197 = vmatmul.bf16.gmra.mxu0 %v1138
    %v1198 = vpop.f32.mrf.mxu0
    %v1199 = vadd.f32 %v1140, %v1198
    %v1200 = vpop.f32.mrf.mxu0
    %v1201 = vadd.f32 %v1140, %v1200
    %1202 = vdwg.mxu0
    %v1203 = vld [vmem:[#allocation2 + $0x11] sm:$0x1]
    %v1204 = vld [vmem:[#allocation2 + $0x12] sm:$0x1]
    %1205 = vadd.xlane.f32.xlu0 %v1199
    %v1206 = vpop.xlane.xlu0 %1205
    %1207 = vadd.xlane.f32.xlu0 %v1201
    %v1208 = vpop.xlane.xlu0 %1207
    %v1209 = vmul.f32 %v1206, %v946
    %v1210 = vmul.f32 %v1208, %v946
    %v1211 = vsub.f32 %v1199, %v1209
    %v1212 = vsub.f32 %v1201, %v1210
    %v1213 = vmul.f32 %v1211, %v1211
    %v1214 = vmul.f32 %v1212, %v1212
    %1215 = vadd.xlane.f32.xlu0 %v1213
    %v1216 = vpop.xlane.xlu0 %1215
    %1217 = vadd.xlane.f32.xlu0 %v1214
    %v1218 = vpop.xlane.xlu0 %1217
    %v1219 = vmul.f32 %v1216, %v946
    %v1220 = vmul.f32 %v1218, %v946
    %v1221 = vadd.f32 %v1219, 1e-05
    %v1222 = vadd.f32 %v1220, 1e-05
    %v1223 = vrsqrt.pop %v1221
    %v1224 = vmul.f32 %v1223, %v1221
    %v1225 = vmul.f32 %v1224, %v1223
    %v1226 = vmul.f32 0.5, %v1225
    %v1227 = vsub.f32 1.5, %v1226
    %v1228 = vmul.f32 %v1223, %v1227
    %vm1229 = vweird.f32 %v1221
    %vm1230 = vweird.f32 %v1223
    %vm1231 = vmor %vm1229, %vm1230
    %v1232 = vsel %vm1231, %v1223, %v1228
    %v1233 = vrsqrt.pop %v1222
    %v1234 = vmul.f32 %v1233, %v1222
    %v1235 = vmul.f32 %v1234, %v1233
    %v1236 = vmul.f32 0.5, %v1235
    %v1237 = vsub.f32 1.5, %v1236
    %v1238 = vmul.f32 %v1233, %v1237
    %vm1239 = vweird.f32 %v1222
    %vm1240 = vweird.f32 %v1233
    %vm1241 = vmor %vm1239, %vm1240
    %v1242 = vsel %vm1241, %v1233, %v1238
    %v1243 = vmul.f32 %v1211, %v1232
    %v1244 = vmul.f32 %v1212, %v1242
    %v1245 = vperm.slane %v1203, 0
    %v1246 = vmul.f32 %v1243, %v1245
    %v1247 = vmul.f32 %v1244, %v1245
    %v1248 = vperm.slane %v1204, 0
    %v1249 = vadd.f32 %v1246, %v1248
    %v1250 = vadd.f32 %v1247, %v1248
    %v1251 = vmax.f32 %v1249, 0.0
    %v1252 = vmax.f32 %v1250, 0.0
    %v1253 = vld [vmem:[%s2 + $0x48] sm:$0xf]
    %v1254 = vld [vmem:[%s2 + $0x4c] sm:$0xf]
    %v1255 = vld [vmem:[%s2 + $0x50] sm:$0xf]
    %v1256 = vld [vmem:[%s2 + $0x54] sm:$0xf]
    %v1257 = vld [vmem:[%s2 + $0x58] sm:$0xf]
    %v1258 = vld [vmem:[%s2 + $0x5c] sm:$0xf]
    %v1259 = vld [vmem:[%s2 + $0x60] sm:$0xf]
    %v1260 = vld [vmem:[%s2 + $0x64] sm:$0xf]
    %v1261 = vld [vmem:[%s2 + $0x68] sm:$0xf]
    %v1262 = vld [vmem:[%s2 + $0x6c] sm:$0xf]
    %v1263 = vld [vmem:[%s2 + $0x70] sm:$0xf]
    %v1264 = vld [vmem:[%s2 + $0x74] sm:$0xf]
    %v1265 = vld [vmem:[%s2 + $0x78] sm:$0xf]
    %v1266 = vld [vmem:[%s2 + $0x7c] sm:$0xf]
    %v1267 = vld [vmem:[%s2 + $0x80] sm:$0xf]
    %v1268 = vld [vmem:[%s2 + $0x84] sm:$0xf]
    %v1269 = vpack.c.bf16 %v1252, %v1251
    %v1286 = vunpack.c.l.b16 %v1253
    %v1287 = vunpack.c.l.b16 %v1254
    %v1288 = vunpack.c.l.b16 %v1255
    %v1289 = vunpack.c.l.b16 %v1256
    %v1290 = vunpack.c.l.b16 %v1257
    %v1291 = vunpack.c.l.b16 %v1258
    %v1292 = vunpack.c.l.b16 %v1259
    %v1293 = vunpack.c.l.b16 %v1260
    %v1294 = vunpack.c.l.b16 %v1261
    %v1295 = vunpack.c.l.b16 %v1262
    %v1296 = vunpack.c.l.b16 %v1263
    %v1297 = vunpack.c.l.b16 %v1264
    %v1298 = vunpack.c.l.b16 %v1265
    %v1299 = vunpack.c.l.b16 %v1266
    %v1300 = vunpack.c.l.b16 %v1267
    %v1301 = vunpack.c.l.b16 %v1268
    %v1302 = vpack.c.b16 %v1287, %v1286
    %v1303 = vpack.c.b16 %v1289, %v1288
    %v1304 = vpack.c.b16 %v1291, %v1290
    %v1305 = vpack.c.b16 %v1293, %v1292
    %v1306 = vpack.c.b16 %v1295, %v1294
    %v1307 = vpack.c.b16 %v1297, %v1296
    %v1308 = vpack.c.b16 %v1299, %v1298
    %v1309 = vpack.c.b16 %v1301, %v1300
    %1318 = vmatpush.bf16.msra.mxu0 %v1309
    %1319 = vmatpush.bf16.msra.mxu0 %v1308
    %1320 = vmatpush.bf16.msra.mxu0 %v1307
    %1321 = vmatpush.bf16.msra.mxu0 %v1306
    %1322 = vmatpush.bf16.msra.mxu0 %v1305
    %1323 = vmatpush.bf16.msra.mxu0 %v1304
    %1324 = vmatpush.bf16.msra.mxu0 %v1303
    %1325 = vmatpush.bf16.msra.mxu0 %v1302
    %1326 = vmatmul.bf16.gmra.mxu0 %v1269
    %v1327 = vpop.f32.mrf.mxu0
    %v1328 = vadd.f32 0.0, %v1327
    %v1329 = vpop.f32.mrf.mxu0
    %v1330 = vadd.f32 0.0, %v1329
    %1331 = vdwg.mxu0
    %v1332 = vadd.f32 %v894, %v1328
    %v1333 = vadd.f32 %v896, %v1330
    %v1334 = vld [vmem:[#allocation2 + $0x6] sm:$0x1]
    %v1335 = vperm.slane %v1334, 0
    %v1336 = vadd.f32 %v1332, %v1335
    %v1337 = vadd.f32 %v1333, %v1335
    %1338 = vst.msk [vmem:[#allocation5] sm:$0xff] %vm90, %v1336
    %1339 = vst.msk [vmem:[#allocation5 + $0x8] sm:$0xff] %vm90, %v1337
    // Predicated region
    $region26: #{jamba_forward.1} parent=1 // pred_check
      _
    $region27: #{jamba_forward.1} parent=1 // pred_check_branch
      %1341 = sbr.rel (0) target = $region29
    $region28: #{jamba_forward.1} parent=1 // pred_region
      %1343 = vsyncadd [#allocation4], 0
      %s1344 = sshll.u32 [#allocation5], 4
      %s1345 = int_to_ptr.vmem [resolvable:$true] %s1344
      %s1346 = sshll.u32 %s5, 4
      %s1347 = int_to_ptr.hbm [resolvable:$true] %s1346
      %1352 = dma.vmem_to_hbm [thread:$0]  %s1345, 256, %s1347, [#allocation4], 128, 128, 8
    $region29: #{jamba_forward.1} parent=1 // pred_fallthru
      _
    // Predicated region
    $region30: #{jamba_forward.1} parent=1 // pred_check
      _
    $region31: #{jamba_forward.1} parent=1 // pred_check_branch
      %1354 = sbr.rel (0) target = $region33
    $region32: #{jamba_forward.1} parent=1 // pred_region
      %1356 = dma.done [#allocation4], 256
    $region33: #{jamba_forward.1} parent=1 // pred_fallthru
      _
    %1357 = vsyncpa [#allocation3], 1
    %1358 = vsyncpa [#allocation4], 1

</llo_original>
